<compile_context>
chip_gen: v7x
topology: tpu7x:2x2x1
jax: 0.10.0
libtpu: 0.0.40
codegen_flags: <defaults>
</compile_context>

<pallas_src>
import jax
import jax.numpy as jnp
from jax.experimental import pallas as pl
from jax.experimental.pallas import tpu as pltpu

INPUT_SIZE = 39
OUTPUT_SIZE = 100
HIDDEN = [300, 500, 500, 300]
DEFAULT_TILE_B = 512


def _round_up(x, m):
    return ((x + m - 1) // m) * m


# Logical and lane-padded layer widths.
DIMS = [INPUT_SIZE] + HIDDEN + [OUTPUT_SIZE]                    # [39,300,500,500,300,100]
DIMS_PAD = [INPUT_SIZE] + [_round_up(d, 128) for d in HIDDEN] \
           + [_round_up(OUTPUT_SIZE, 128)]                      # [39,384,512,512,384,128]
OUT_PAD = DIMS_PAD[-1]


def mlp_kernel(x_ref,
               w1_ref, b1_ref,
               w2_ref, b2_ref,
               w3_ref, b3_ref,
               w4_ref, b4_ref,
               w5_ref, b5_ref,
               o_ref):
    # All weight tiles VMEM-resident (constant index_map). Hot path: 5 MXU
    # matmuls (bf16 inputs, f32 accumulate) with fused bias + ReLU epilogue.
    h = x_ref[...].astype(jnp.bfloat16)  # f32 [TB, 39] -> bf16 on the VPU

    zero = jnp.bfloat16(0)

    h = jnp.dot(h, w1_ref[...], preferred_element_type=jnp.float32) + b1_ref[...]
    h = jnp.maximum(h.astype(jnp.bfloat16), zero)

    h = jnp.dot(h, w2_ref[...], preferred_element_type=jnp.float32) + b2_ref[...]
    h = jnp.maximum(h.astype(jnp.bfloat16), zero)

    h = jnp.dot(h, w3_ref[...], preferred_element_type=jnp.float32) + b3_ref[...]
    h = jnp.maximum(h.astype(jnp.bfloat16), zero)

    h = jnp.dot(h, w4_ref[...], preferred_element_type=jnp.float32) + b4_ref[...]
    h = jnp.maximum(h.astype(jnp.bfloat16), zero)

    # Final layer (padded to 128 cols): no activation, f32 output.
    out = jnp.dot(h, w5_ref[...], preferred_element_type=jnp.float32) + b5_ref[...]
    o_ref[...] = out.astype(o_ref.dtype)


def prepare_params(params):
    """Zero-pad every layer to the lane-dense padded dims; cast weights to
    bf16 and keep biases f32.  Padding is zeros so ReLU keeps the padded
    activation columns at exactly 0 -> numerics unchanged."""
    prepared = []
    for i, (w, b) in enumerate(params):
        in_pad = DIMS_PAD[i] - w.shape[0]
        out_pad = DIMS_PAD[i + 1] - w.shape[1]
        w = jnp.pad(w, ((0, in_pad), (0, out_pad)))
        b = jnp.pad(b, ((0, 0), (0, out_pad)))
        prepared.append((w.astype(jnp.bfloat16), b.astype(jnp.float32)))
    return prepared


def _choose_tile(B, tile_b):
    """Pick the batch tile.

    - Tiny batches: a single tile rounded up to 16 rows (bf16 sublane pack).
    - Otherwise: cap at tile_b but also aim for >= 2 grid steps so the two
      TensorCores on v7x both get work, while keeping batch-padding waste
      bounded (tb tracks ~ceil(B/2) instead of blindly rounding B up to a
      full tile_b multiple).
    """
    if B <= 64:
        return _round_up(B, 16)
    return min(tile_b, _round_up(pl.cdiv(B, 2), 16))


def mlp_forward(x, params, *, tile_b=DEFAULT_TILE_B):
    """x: [B, INPUT_SIZE] f32. params: raw f32 [(w[in,out], b[1,out]), ...]."""
    B, F = x.shape
    assert F == INPUT_SIZE

    tb = _choose_tile(B, tile_b)
    B_pad = _round_up(B, tb)

    # Keep x f32; only pad the batch.  The bf16 cast happens in-kernel.
    x_pad = x if B_pad == B else jnp.pad(x, ((0, B_pad - B), (0, 0)))
    prepped = prepare_params(params)

    flat_args = [x_pad]
    for (w, b) in prepped:
        flat_args.append(w)
        flat_args.append(b)

    in_specs = [pl.BlockSpec((tb, F), lambda i: (i, 0))]
    for (w, b) in prepped:
        # Full-array blocks + constant index_map -> weights stay resident in
        # VMEM across all batch tiles (DMA'd once).
        in_specs.append(pl.BlockSpec(w.shape, lambda i: (0, 0)))
        in_specs.append(pl.BlockSpec(b.shape, lambda i: (0, 0)))

    out_specs = pl.BlockSpec((tb, OUT_PAD), lambda i: (i, 0))

    flops = 2 * B_pad * sum(DIMS_PAD[i] * DIMS_PAD[i + 1]
                            for i in range(len(DIMS_PAD) - 1))
    weight_bytes = sum(w.size * w.dtype.itemsize + b.size * b.dtype.itemsize
                       for (w, b) in prepped)
    bytes_accessed = (weight_bytes
                      + x_pad.size * x_pad.dtype.itemsize
                      + B_pad * OUT_PAD * 4)

    out_padded = pl.pallas_call(
        mlp_kernel,
        out_shape=jax.ShapeDtypeStruct((B_pad, OUT_PAD), jnp.float32),
        grid=(B_pad // tb,),
        in_specs=in_specs,
        out_specs=out_specs,
        compiler_params=pltpu.CompilerParams(
            dimension_semantics=("parallel",)),
        cost_estimate=pl.CostEstimate(
            flops=flops, transcendentals=0, bytes_accessed=bytes_accessed),
    )(*flat_args)

    # Strip batch padding and the lane-padding on the output features.
    return out_padded[:B, :OUTPUT_SIZE]


def init_params(key):
    """Deterministic init mimicking PyTorch Linear default (uniform +/- 1/sqrt(fan_in))."""
    params = []
    for i in range(len(DIMS) - 1):
        fan_in, fan_out = DIMS[i], DIMS[i + 1]
        key, kw, kb = jax.random.split(key, 3)
        bound = 1.0 / (fan_in ** 0.5)
        w = jax.random.uniform(kw, (fan_in, fan_out), jnp.float32, -bound, bound)
        # bias kept 2D [1, out] so it broadcasts cleanly on the (sublane, lane) tile
        b = jax.random.uniform(kb, (1, fan_out), jnp.float32, -bound, bound)
        params.append((w, b))
    return params


def reference_forward(x, params):
    """Matches kernel numerics: bf16 inputs/weights, f32 accumulate, f32 bias.
    (vs. the original f32 PyTorch Net, bf16 weights over 500-wide reductions
    need a looser tolerance than 1e-3 — verify that is acceptable.)"""
    h = x.astype(jnp.bfloat16)
    for i, (w, b) in enumerate(params):
        h = jnp.dot(h, w.astype(jnp.bfloat16),
                    preferred_element_type=jnp.float32) + b
        if i < len(params) - 1:
            h = jnp.maximum(h, 0.0).astype(jnp.bfloat16)
    return h


if __name__ == "__main__":
    key = jax.random.PRNGKey(0)
    key, kx = jax.random.split(key)

    B = 8  # small batch
    x = jax.random.normal(kx, (B, INPUT_SIZE), jnp.float32)

    params = init_params(key)

    out = mlp_forward(x, params)
    out = jax.block_until_ready(out)

    ref = reference_forward(x, params)
    assert out.shape == (B, OUTPUT_SIZE)
    assert jnp.allclose(out, ref, atol=2e-2, rtol=2e-2), (
        float(jnp.max(jnp.abs(out - ref))))

    print("KERNEL_OK")
</pallas_src>

<mosaic_0001>
module attributes {stable_mosaic.version = 11 : i64} {
  func.func @mlp_kernel(%arg0: i32, %arg1: memref<16x39xf32, #tpu.memory_space<vmem>>, %arg2: memref<39x384xbf16, #tpu.memory_space<vmem>>, %arg3: memref<1x384xf32, #tpu.memory_space<vmem>>, %arg4: memref<384x512xbf16, #tpu.memory_space<vmem>>, %arg5: memref<1x512xf32, #tpu.memory_space<vmem>>, %arg6: memref<512x512xbf16, #tpu.memory_space<vmem>>, %arg7: memref<1x512xf32, #tpu.memory_space<vmem>>, %arg8: memref<512x384xbf16, #tpu.memory_space<vmem>>, %arg9: memref<1x384xf32, #tpu.memory_space<vmem>>, %arg10: memref<384x128xbf16, #tpu.memory_space<vmem>>, %arg11: memref<1x128xf32, #tpu.memory_space<vmem>>, %arg12: memref<16x128xf32, #tpu.memory_space<vmem>>) attributes {dimension_semantics = [#tpu.dimension_semantics<parallel>], iteration_bounds = array<i64: 1>, scalar_prefetch = 0 : i64, scratch_operands = 0 : i64, tpu.core_type = #tpu.core_type<tc>, window_params = [{transform_indices = @transform_0, window_bounds = array<i64: 16, 39>}, {pipeline_mode = #tpu.pipeline_mode<synchronous>, transform_indices = @transform_1, window_bounds = array<i64: 39, 384>}, {pipeline_mode = #tpu.pipeline_mode<synchronous>, transform_indices = @transform_2, window_bounds = array<i64: 1, 384>}, {pipeline_mode = #tpu.pipeline_mode<synchronous>, transform_indices = @transform_3, window_bounds = array<i64: 384, 512>}, {pipeline_mode = #tpu.pipeline_mode<synchronous>, transform_indices = @transform_4, window_bounds = array<i64: 1, 512>}, {pipeline_mode = #tpu.pipeline_mode<synchronous>, transform_indices = @transform_5, window_bounds = array<i64: 512, 512>}, {pipeline_mode = #tpu.pipeline_mode<synchronous>, transform_indices = @transform_6, window_bounds = array<i64: 1, 512>}, {pipeline_mode = #tpu.pipeline_mode<synchronous>, transform_indices = @transform_7, window_bounds = array<i64: 512, 384>}, {pipeline_mode = #tpu.pipeline_mode<synchronous>, transform_indices = @transform_8, window_bounds = array<i64: 1, 384>}, {pipeline_mode = #tpu.pipeline_mode<synchronous>, transform_indices = @transform_9, window_bounds = array<i64: 384, 128>}, {pipeline_mode = #tpu.pipeline_mode<synchronous>, transform_indices = @transform_10, window_bounds = array<i64: 1, 128>}, {transform_indices = @transform_11, window_bounds = array<i64: 16, 128>}]} {
    %c0 = arith.constant 0 : index
    %c0_0 = arith.constant 0 : index
    %0 = vector.load %arg1[%c0, %c0_0] : memref<16x39xf32, #tpu.memory_space<vmem>>, vector<16x39xf32>
    %1 = arith.truncf %0 : vector<16x39xf32> to vector<16x39xbf16>
    %c0_1 = arith.constant 0 : index
    %c0_2 = arith.constant 0 : index
    %2 = vector.load %arg2[%c0_1, %c0_2] : memref<39x384xbf16, #tpu.memory_space<vmem>>, vector<39x384xbf16>
    %cst = arith.constant dense<0.000000e+00> : vector<16x384xf32>
    %3 = tpu.matmul %1, %2, %cst {dimension_numbers = #tpu.dot_dimension_numbers<[1], [0], [0], [1], [0, 0, 1, 1], [], []>} : vector<16x39xbf16>, vector<39x384xbf16>, vector<16x384xf32> -> vector<16x384xf32>
    %c0_3 = arith.constant 0 : index
    %c0_4 = arith.constant 0 : index
    %4 = vector.load %arg3[%c0_3, %c0_4] : memref<1x384xf32, #tpu.memory_space<vmem>>, vector<1x384xf32>
    %5 = vector.broadcast %4 : vector<1x384xf32> to vector<16x384xf32>
    %6 = arith.addf %3, %5 : vector<16x384xf32>
    %7 = arith.truncf %6 : vector<16x384xf32> to vector<16x384xbf16>
    %cst_5 = arith.constant 0.000000e+00 : bf16
    %8 = vector.broadcast %cst_5 : bf16 to vector<16x384xbf16>
    %9 = arith.maximumf %7, %8 : vector<16x384xbf16>
    %c0_6 = arith.constant 0 : index
    %c0_7 = arith.constant 0 : index
    %10 = vector.load %arg4[%c0_6, %c0_7] : memref<384x512xbf16, #tpu.memory_space<vmem>>, vector<384x512xbf16>
    %cst_8 = arith.constant dense<0.000000e+00> : vector<16x512xf32>
    %11 = tpu.matmul %9, %10, %cst_8 {dimension_numbers = #tpu.dot_dimension_numbers<[1], [0], [0], [1], [0, 0, 1, 1], [], []>} : vector<16x384xbf16>, vector<384x512xbf16>, vector<16x512xf32> -> vector<16x512xf32>
    %c0_9 = arith.constant 0 : index
    %c0_10 = arith.constant 0 : index
    %12 = vector.load %arg5[%c0_9, %c0_10] : memref<1x512xf32, #tpu.memory_space<vmem>>, vector<1x512xf32>
    %13 = vector.broadcast %12 : vector<1x512xf32> to vector<16x512xf32>
    %14 = arith.addf %11, %13 : vector<16x512xf32>
    %15 = arith.truncf %14 : vector<16x512xf32> to vector<16x512xbf16>
    %cst_11 = arith.constant 0.000000e+00 : bf16
    %16 = vector.broadcast %cst_11 : bf16 to vector<16x512xbf16>
    %17 = arith.maximumf %15, %16 : vector<16x512xbf16>
    %c0_12 = arith.constant 0 : index
    %c0_13 = arith.constant 0 : index
    %18 = vector.load %arg6[%c0_12, %c0_13] : memref<512x512xbf16, #tpu.memory_space<vmem>>, vector<512x512xbf16>
    %cst_14 = arith.constant dense<0.000000e+00> : vector<16x512xf32>
    %19 = tpu.matmul %17, %18, %cst_14 {dimension_numbers = #tpu.dot_dimension_numbers<[1], [0], [0], [1], [0, 0, 1, 1], [], []>} : vector<16x512xbf16>, vector<512x512xbf16>, vector<16x512xf32> -> vector<16x512xf32>
    %c0_15 = arith.constant 0 : index
    %c0_16 = arith.constant 0 : index
    %20 = vector.load %arg7[%c0_15, %c0_16] : memref<1x512xf32, #tpu.memory_space<vmem>>, vector<1x512xf32>
    %21 = vector.broadcast %20 : vector<1x512xf32> to vector<16x512xf32>
    %22 = arith.addf %19, %21 : vector<16x512xf32>
    %23 = arith.truncf %22 : vector<16x512xf32> to vector<16x512xbf16>
    %cst_17 = arith.constant 0.000000e+00 : bf16
    %24 = vector.broadcast %cst_17 : bf16 to vector<16x512xbf16>
    %25 = arith.maximumf %23, %24 : vector<16x512xbf16>
    %c0_18 = arith.constant 0 : index
    %c0_19 = arith.constant 0 : index
    %26 = vector.load %arg8[%c0_18, %c0_19] : memref<512x384xbf16, #tpu.memory_space<vmem>>, vector<512x384xbf16>
    %cst_20 = arith.constant dense<0.000000e+00> : vector<16x384xf32>
    %27 = tpu.matmul %25, %26, %cst_20 {dimension_numbers = #tpu.dot_dimension_numbers<[1], [0], [0], [1], [0, 0, 1, 1], [], []>} : vector<16x512xbf16>, vector<512x384xbf16>, vector<16x384xf32> -> vector<16x384xf32>
    %c0_21 = arith.constant 0 : index
    %c0_22 = arith.constant 0 : index
    %28 = vector.load %arg9[%c0_21, %c0_22] : memref<1x384xf32, #tpu.memory_space<vmem>>, vector<1x384xf32>
    %29 = vector.broadcast %28 : vector<1x384xf32> to vector<16x384xf32>
    %30 = arith.addf %27, %29 : vector<16x384xf32>
    %31 = arith.truncf %30 : vector<16x384xf32> to vector<16x384xbf16>
    %cst_23 = arith.constant 0.000000e+00 : bf16
    %32 = vector.broadcast %cst_23 : bf16 to vector<16x384xbf16>
    %33 = arith.maximumf %31, %32 : vector<16x384xbf16>
    %c0_24 = arith.constant 0 : index
    %c0_25 = arith.constant 0 : index
    %34 = vector.load %arg10[%c0_24, %c0_25] : memref<384x128xbf16, #tpu.memory_space<vmem>>, vector<384x128xbf16>
    %cst_26 = arith.constant dense<0.000000e+00> : vector<16x128xf32>
    %35 = tpu.matmul %33, %34, %cst_26 {dimension_numbers = #tpu.dot_dimension_numbers<[1], [0], [0], [1], [0, 0, 1, 1], [], []>} : vector<16x384xbf16>, vector<384x128xbf16>, vector<16x128xf32> -> vector<16x128xf32>
    %c0_27 = arith.constant 0 : index
    %c0_28 = arith.constant 0 : index
    %36 = vector.load %arg11[%c0_27, %c0_28] : memref<1x128xf32, #tpu.memory_space<vmem>>, vector<1x128xf32>
    %37 = vector.broadcast %36 : vector<1x128xf32> to vector<16x128xf32>
    %38 = arith.addf %35, %37 : vector<16x128xf32>
    %c0_29 = arith.constant 0 : index
    %c0_30 = arith.constant 0 : index
    %39 = vector.load %arg12[%c0_29, %c0_30] : memref<16x128xf32, #tpu.memory_space<vmem>>, vector<16x128xf32>
    tpu.vector_store %arg12[%c0_29, %c0_30], %38 {strides = array<i32>} : memref<16x128xf32, #tpu.memory_space<vmem>>, vector<16x128xf32>,
    return
  }
  func.func @transform_0(%arg0: i32) -> (i32, i32) {
    %c0_i32 = arith.constant 0 : i32
    %c0_i32_0 = arith.constant 0 : i32
    return %arg0, %c0_i32 : i32, i32
  }
  func.func @transform_1(%arg0: i32) -> (i32, i32) {
    %c0_i32 = arith.constant 0 : i32
    %c0_i32_0 = arith.constant 0 : i32
    %c0_i32_1 = arith.constant 0 : i32
    return %c0_i32, %c0_i32_0 : i32, i32
  }
  func.func @transform_2(%arg0: i32) -> (i32, i32) {
    %c0_i32 = arith.constant 0 : i32
    %c0_i32_0 = arith.constant 0 : i32
    %c0_i32_1 = arith.constant 0 : i32
    return %c0_i32, %c0_i32_0 : i32, i32
  }
  func.func @transform_3(%arg0: i32) -> (i32, i32) {
    %c0_i32 = arith.constant 0 : i32
    %c0_i32_0 = arith.constant 0 : i32
    %c0_i32_1 = arith.constant 0 : i32
    return %c0_i32, %c0_i32_0 : i32, i32
  }
  func.func @transform_4(%arg0: i32) -> (i32, i32) {
    %c0_i32 = arith.constant 0 : i32
    %c0_i32_0 = arith.constant 0 : i32
    %c0_i32_1 = arith.constant 0 : i32
    return %c0_i32, %c0_i32_0 : i32, i32
  }
  func.func @transform_5(%arg0: i32) -> (i32, i32) {
    %c0_i32 = arith.constant 0 : i32
    %c0_i32_0 = arith.constant 0 : i32
    %c0_i32_1 = arith.constant 0 : i32
    return %c0_i32, %c0_i32_0 : i32, i32
  }
  func.func @transform_6(%arg0: i32) -> (i32, i32) {
    %c0_i32 = arith.constant 0 : i32
    %c0_i32_0 = arith.constant 0 : i32
    %c0_i32_1 = arith.constant 0 : i32
    return %c0_i32, %c0_i32_0 : i32, i32
  }
  func.func @transform_7(%arg0: i32) -> (i32, i32) {
    %c0_i32 = arith.constant 0 : i32
    %c0_i32_0 = arith.constant 0 : i32
    %c0_i32_1 = arith.constant 0 : i32
    return %c0_i32, %c0_i32_0 : i32, i32
  }
  func.func @transform_8(%arg0: i32) -> (i32, i32) {
    %c0_i32 = arith.constant 0 : i32
    %c0_i32_0 = arith.constant 0 : i32
    %c0_i32_1 = arith.constant 0 : i32
    return %c0_i32, %c0_i32_0 : i32, i32
  }
  func.func @transform_9(%arg0: i32) -> (i32, i32) {
    %c0_i32 = arith.constant 0 : i32
    %c0_i32_0 = arith.constant 0 : i32
    %c0_i32_1 = arith.constant 0 : i32
    return %c0_i32, %c0_i32_0 : i32, i32
  }
  func.func @transform_10(%arg0: i32) -> (i32, i32) {
    %c0_i32 = arith.constant 0 : i32
    %c0_i32_0 = arith.constant 0 : i32
    %c0_i32_1 = arith.constant 0 : i32
    return %c0_i32, %c0_i32_0 : i32, i32
  }
  func.func @transform_11(%arg0: i32) -> (i32, i32) {
    %c0_i32 = arith.constant 0 : i32
    %c0_i32_0 = arith.constant 0 : i32
    return %arg0, %c0_i32 : i32, i32
  }
}

</mosaic_0001>

<llo_original>
// kernel: tpu_custom_call.1
$region0: #{tpu_custom_call.1}
  #allocation0 [shape = 'u32[]', space=smem, size = 0x4, offset = 0x4, fixed_abs, tag = 'smem constant byte address 0x4 - core index']
  #allocation1 [shape = 'u32[144,128]{1,0:T(1,128)}', space=vmem, size = 0x12000, scoped, tag = 'internal scratch']
  %s0 = inlined_call_operand.hbm [shape: f32[16,39], index: 0, kind: input, shape index: {}]
  %s1 = inlined_call_operand.hbm [shape: bf16[39,384], index: 1, kind: input, shape index: {}]
  %s2 = inlined_call_operand.vmem [shape: f32[1,384], index: 2, kind: input, shape index: {}]
  %s3 = inlined_call_operand.hbm [shape: bf16[384,512], index: 3, kind: input, shape index: {}]
  %s4 = inlined_call_operand.vmem [shape: f32[1,512], index: 4, kind: input, shape index: {}]
  %s5 = inlined_call_operand.hbm [shape: bf16[512,512], index: 5, kind: input, shape index: {}]
  %s6 = inlined_call_operand.vmem [shape: f32[1,512], index: 6, kind: input, shape index: {}]
  %s7 = inlined_call_operand.hbm [shape: bf16[512,384], index: 7, kind: input, shape index: {}]
  %s8 = inlined_call_operand.vmem [shape: f32[1,384], index: 8, kind: input, shape index: {}]
  %s9 = inlined_call_operand.hbm [shape: bf16[384,128], index: 9, kind: input, shape index: {}]
  %s10 = inlined_call_operand.vmem [shape: f32[1,128], index: 10, kind: input, shape index: {}]
  %s11 = inlined_call_operand.hbm [shape: f32[16,128], index: 11, kind: output, shape index: {}]
  %s12 = sld [smem:[#allocation0]]
  $region78: #{tpu_custom_call.1} parent=0
    _
  %s14 = ssub.s32 1, %s12
  %s15 = scalar_select 0, %s14, %s12
  $region1: #{tpu_custom_call.1} parent=0
    #allocation2 [shape = 'u8[8192]{0}', space=vmem, size = 0x2000, scoped, tag = 'input window, operand 0, single buffered']
    #allocation3 [shape = 's32[1]{0}', space=sflag, size = 0x4, scoped, tag = 'scoped memory for tpu_custom_call.1']
    #allocation4 [shape = 's32[1]{0}', space=sflag, size = 0x4, scoped, tag = 'scoped memory for tpu_custom_call.1']
    #allocation5 [shape = 'u8[30720]{0}', space=vmem, size = 0x7800, scoped, tag = 'input window, operand 1, single buffered']
    #allocation6 [shape = 's32[1]{0}', space=sflag, size = 0x4, scoped, tag = 'scoped memory for tpu_custom_call.1']
    #allocation7 [shape = 'u8[393216]{0}', space=vmem, size = 0x60000, scoped, tag = 'input window, operand 3, single buffered']
    #allocation8 [shape = 'u8[524288]{0}', space=vmem, size = 0x80000, scoped, tag = 'input window, operand 5, single buffered']
    #allocation9 [shape = 's32[1]{0}', space=sflag, size = 0x4, scoped, tag = 'scoped memory for tpu_custom_call.1']
    #allocation10 [shape = 'u8[393216]{0}', space=vmem, size = 0x60000, scoped, tag = 'input window, operand 7, single buffered']
    #allocation11 [shape = 'u8[98304]{0}', space=vmem, size = 0x18000, scoped, tag = 'input window, operand 9, single buffered']
    #allocation12 [shape = 's32[1]{0}', space=sflag, size = 0x4, scoped, tag = 'scoped memory for tpu_custom_call.1']
    #allocation13 [shape = 'u8[8192]{0}', space=vmem, size = 0x2000, scoped, tag = 'output window, operand 0, single buffered']
    %16 = vsyncpa [#allocation3], 0
    %17 = vsyncpa [#allocation6], 0
    %18 = vsyncpa [#allocation9], 0
    %19 = vsyncpa [#allocation12], 0
    %20 = vsyncpa [#allocation4], 0
    // Predicated region
    $region2: #{tpu_custom_call.1} parent=1 // pred_check
      _
    $region3: #{tpu_custom_call.1} parent=1 // pred_check_branch
      %22 = sbr.rel (0) target = $region5
    $region4: #{tpu_custom_call.1} parent=1 // pred_region
      %s24 = ssub.s32 256, 256
      %25 = vsyncadd [#allocation3], %s24
      %s26 = sshll.u32 [#allocation2], 4
      %s27 = int_to_ptr.vmem [resolvable:$true] %s26
      %32 = dma.hbm_to_vmem [thread:$0]  %s0, 256, %s27, [#allocation3], 128, 128, 8
    $region5: #{tpu_custom_call.1} parent=1 // pred_fallthru
      _
    // Predicated region
    $region6: #{tpu_custom_call.1} parent=1 // pred_check
      _
    $region7: #{tpu_custom_call.1} parent=1 // pred_check_branch
      %34 = sbr.rel (0) target = $region9
    $region8: #{tpu_custom_call.1} parent=1 // pred_region
      %s36 = ssub.s32 960, 960
      %37 = vsyncadd [#allocation6], %s36
      %s38 = sshll.u32 [#allocation5], 4
      %s39 = int_to_ptr.vmem [resolvable:$true] %s38
      %44 = dma.hbm_to_vmem [thread:$0]  %s1, 960, %s39, [#allocation6], 192, 192, 12
    $region9: #{tpu_custom_call.1} parent=1 // pred_fallthru
      _
    // Predicated region
    $region10: #{tpu_custom_call.1} parent=1 // pred_check
      _
    $region11: #{tpu_custom_call.1} parent=1 // pred_check_branch
      %46 = sbr.rel (0) target = $region13
    $region12: #{tpu_custom_call.1} parent=1 // pred_region
      _
    $region13: #{tpu_custom_call.1} parent=1 // pred_fallthru
      _
    // Predicated region
    $region14: #{tpu_custom_call.1} parent=1 // pred_check
      _
    $region15: #{tpu_custom_call.1} parent=1 // pred_check_branch
      %48 = sbr.rel (0) target = $region17
    $region16: #{tpu_custom_call.1} parent=1 // pred_region
      %s50 = ssub.s32 12288, 12288
      %51 = vsyncadd [#allocation6], %s50
      %s52 = sshll.u32 [#allocation7], 4
      %s53 = int_to_ptr.vmem [resolvable:$true] %s52
      %58 = dma.hbm_to_vmem [thread:$0]  %s3, 12288, %s53, [#allocation6], 256, 256, 16
    $region17: #{tpu_custom_call.1} parent=1 // pred_fallthru
      _
    // Predicated region
    $region18: #{tpu_custom_call.1} parent=1 // pred_check
      _
    $region19: #{tpu_custom_call.1} parent=1 // pred_check_branch
      %60 = sbr.rel (0) target = $region21
    $region20: #{tpu_custom_call.1} parent=1 // pred_region
      _
    $region21: #{tpu_custom_call.1} parent=1 // pred_fallthru
      _
    // Predicated region
    $region22: #{tpu_custom_call.1} parent=1 // pred_check
      _
    $region23: #{tpu_custom_call.1} parent=1 // pred_check_branch
      %62 = sbr.rel (0) target = $region25
    $region24: #{tpu_custom_call.1} parent=1 // pred_region
      %s64 = ssub.s32 16384, 16384
      %65 = vsyncadd [#allocation9], %s64
      %s66 = sshll.u32 [#allocation8], 4
      %s67 = int_to_ptr.vmem [resolvable:$true] %s66
      %72 = dma.hbm_to_vmem [thread:$0]  %s5, 16384, %s67, [#allocation9], 256, 256, 16
    $region25: #{tpu_custom_call.1} parent=1 // pred_fallthru
      _
    // Predicated region
    $region26: #{tpu_custom_call.1} parent=1 // pred_check
      _
    $region27: #{tpu_custom_call.1} parent=1 // pred_check_branch
      %74 = sbr.rel (0) target = $region29
    $region28: #{tpu_custom_call.1} parent=1 // pred_region
      _
    $region29: #{tpu_custom_call.1} parent=1 // pred_fallthru
      _
    // Predicated region
    $region30: #{tpu_custom_call.1} parent=1 // pred_check
      _
    $region31: #{tpu_custom_call.1} parent=1 // pred_check_branch
      %76 = sbr.rel (0) target = $region33
    $region32: #{tpu_custom_call.1} parent=1 // pred_region
      %s78 = ssub.s32 12288, 12288
      %79 = vsyncadd [#allocation9], %s78
      %s80 = sshll.u32 [#allocation10], 4
      %s81 = int_to_ptr.vmem [resolvable:$true] %s80
      %86 = dma.hbm_to_vmem [thread:$0]  %s7, 12288, %s81, [#allocation9], 192, 192, 12
    $region33: #{tpu_custom_call.1} parent=1 // pred_fallthru
      _
    // Predicated region
    $region34: #{tpu_custom_call.1} parent=1 // pred_check
      _
    $region35: #{tpu_custom_call.1} parent=1 // pred_check_branch
      %88 = sbr.rel (0) target = $region37
    $region36: #{tpu_custom_call.1} parent=1 // pred_region
      _
    $region37: #{tpu_custom_call.1} parent=1 // pred_fallthru
      _
    // Predicated region
    $region38: #{tpu_custom_call.1} parent=1 // pred_check
      _
    $region39: #{tpu_custom_call.1} parent=1 // pred_check_branch
      %90 = sbr.rel (0) target = $region41
    $region40: #{tpu_custom_call.1} parent=1 // pred_region
      %s92 = ssub.s32 3072, 3072
      %93 = vsyncadd [#allocation12], %s92
      %s94 = sshll.u32 [#allocation11], 4
      %s95 = int_to_ptr.vmem [resolvable:$true] %s94
      %100 = dma.hbm_to_vmem [thread:$0]  %s9, 3072, %s95, [#allocation12], 64, 64, 4
    $region41: #{tpu_custom_call.1} parent=1 // pred_fallthru
      _
    // Predicated region
    $region42: #{tpu_custom_call.1} parent=1 // pred_check
      _
    $region43: #{tpu_custom_call.1} parent=1 // pred_check_branch
      %102 = sbr.rel (0) target = $region45
    $region44: #{tpu_custom_call.1} parent=1 // pred_region
      _
    $region45: #{tpu_custom_call.1} parent=1 // pred_fallthru
      _
    // Predicated region
    $region46: #{tpu_custom_call.1} parent=1 // pred_check
      _
    $region47: #{tpu_custom_call.1} parent=1 // pred_check_branch
      %104 = sbr.rel (0) target = $region49
    $region48: #{tpu_custom_call.1} parent=1 // pred_region
      %105 = dma.done [#allocation3], 256
    $region49: #{tpu_custom_call.1} parent=1 // pred_fallthru
      _
    // Predicated region
    $region50: #{tpu_custom_call.1} parent=1 // pred_check
      _
    $region51: #{tpu_custom_call.1} parent=1 // pred_check_branch
      %107 = sbr.rel (0) target = $region53
    $region52: #{tpu_custom_call.1} parent=1 // pred_region
      %108 = dma.done [#allocation6], 960
    $region53: #{tpu_custom_call.1} parent=1 // pred_fallthru
      _
    // Predicated region
    $region54: #{tpu_custom_call.1} parent=1 // pred_check
      _
    $region55: #{tpu_custom_call.1} parent=1 // pred_check_branch
      %110 = sbr.rel (0) target = $region57
    $region56: #{tpu_custom_call.1} parent=1 // pred_region
      %111 = dma.done [#allocation6], 12288
    $region57: #{tpu_custom_call.1} parent=1 // pred_fallthru
      _
    // Predicated region
    $region58: #{tpu_custom_call.1} parent=1 // pred_check
      _
    $region59: #{tpu_custom_call.1} parent=1 // pred_check_branch
      %113 = sbr.rel (0) target = $region61
    $region60: #{tpu_custom_call.1} parent=1 // pred_region
      %114 = dma.done [#allocation9], 16384
    $region61: #{tpu_custom_call.1} parent=1 // pred_fallthru
      _
    // Predicated region
    $region62: #{tpu_custom_call.1} parent=1 // pred_check
      _
    $region63: #{tpu_custom_call.1} parent=1 // pred_check_branch
      %116 = sbr.rel (0) target = $region65
    $region64: #{tpu_custom_call.1} parent=1 // pred_region
      %117 = dma.done [#allocation9], 12288
    $region65: #{tpu_custom_call.1} parent=1 // pred_fallthru
      _
    // Predicated region
    $region66: #{tpu_custom_call.1} parent=1 // pred_check
      _
    $region67: #{tpu_custom_call.1} parent=1 // pred_check_branch
      %119 = sbr.rel (0) target = $region69
    $region68: #{tpu_custom_call.1} parent=1 // pred_region
      %120 = dma.done [#allocation12], 3072
    $region69: #{tpu_custom_call.1} parent=1 // pred_fallthru
      _
    %v122 = vld [vmem:[#allocation2] sm:$0xff]
    %v123 = vld [vmem:[#allocation2 + $0x8] sm:$0xff]
    %v124 = vpack.c.bf16 %v123, %v122
    %v125 = vld [vmem:[#allocation5] sm:$0xff]
    %v126 = vld [vmem:[#allocation5 + $0x8] sm:$0xf]
    %v127 = vld [vmem:[#allocation5 + $0xc] sm:$0xff]
    %v128 = vld [vmem:[#allocation5 + $0x14] sm:$0xf]
    %v129 = vld [vmem:[#allocation5 + $0x18] sm:$0xff]
    %v130 = vld [vmem:[#allocation5 + $0x20] sm:$0xf]
    %v131 = vld [vmem:[#allocation5 + $0x24] sm:$0xff]
    %v132 = vld [vmem:[#allocation5 + $0x2c] sm:$0xf]
    %v133 = vld [vmem:[#allocation5 + $0x30] sm:$0xff]
    %v134 = vld [vmem:[#allocation5 + $0x38] sm:$0xf]
    %v135 = vld [vmem:[%s2] sm:$0x7]
    %v137 = vlaneseq
    %v138 = vshrl.u32 %v137, 7
    %v139 = vsub.s32 0, %v138
    %v140 = vrot.slane %v135, %v139
    %v141 = vlaneseq
    %v142 = vshrl.u32 %v141, 7
    %v143 = vsub.s32 1, %v142
    %v144 = vrot.slane %v135, %v143
    %v145 = vlaneseq
    %v146 = vshrl.u32 %v145, 7
    %v147 = vsub.s32 2, %v146
    %v148 = vrot.slane %v135, %v147
    %v162 = vunpack.c.l.b16 %v125
    %v163 = vunpack.c.h.b16 %v125
    %v164 = vunpack.c.l.b16 %v126
    %v165 = vunpack.c.l.b16 %v127
    %v166 = vunpack.c.h.b16 %v127
    %v167 = vunpack.c.l.b16 %v128
    %v168 = vunpack.c.l.b16 %v129
    %v169 = vunpack.c.h.b16 %v129
    %v170 = vunpack.c.l.b16 %v130
    %v171 = vunpack.c.l.b16 %v131
    %v172 = vunpack.c.h.b16 %v131
    %v173 = vunpack.c.l.b16 %v132
    %v174 = vunpack.c.l.b16 %v133
    %v175 = vunpack.c.h.b16 %v133
    %v176 = vunpack.c.l.b16 %v134
    %v177 = vpack.c.b16 %v165, %v162
    %v178 = vpack.c.b16 %v166, %v163
    %v179 = vpack.c.b16 %v167, %v164
    %v180 = vpack.c.b16 %v171, %v168
    %v181 = vpack.c.b16 %v172, %v169
    %v182 = vpack.c.b16 %v173, %v170
    %v183 = vpack.c.b16 %v174, %v174
    %v184 = vpack.c.b16 %v175, %v175
    %v185 = vpack.c.b16 %v176, %v176
    %vm192 = vcmask 318464
    %v194 = vsel %vm192, %v124, 0
    %vm196 = vcmask 1042432
    %vm197 = vcmask 1043456
    %v198 = vsel %vm196, 4294967295, 65535
    %v199 = vsel %vm197, %v198, 0
    %v201 = vand.u32 %v183, %v199
    %v204 = vand.u32 %v184, %v199
    %v207 = vand.u32 %v185, %v199
    %209 = vmatprep.subr.bf16.mxu0 %v178
    %210 = vmatpush1.bf16.msra.mxu0 %v177
    %211 = vmatprep.subr.bf16.mxu0 %v181
    %212 = vmatpush1.bf16.msra.mxu0 %v180
    %213 = vmatprep.subr.bf16.mxu0 %v204
    %214 = vmatpush1.bf16.msra.mxu0 %v201
    %215 = vmatprep.subr.bf16.mxu0 0
    %216 = vmatpush1.bf16.msra.mxu0 0
    %217 = vmatprep.subr.bf16.mxu0 0
    %218 = vmatpush1.bf16.msra.mxu0 0
    %219 = vmatprep.subr.bf16.mxu0 0
    %220 = vmatpush1.bf16.msra.mxu0 0
    %221 = vmatprep.subr.bf16.mxu0 0
    %222 = vmatpush1.bf16.msra.mxu0 0
    %223 = vmatprep.subr.bf16.mxu0 0
    %224 = vmatpush1.bf16.msra.mxu0 0
    %225 = vmatprep.subr.bf16.mxu0 0
    %226 = vmatpush1.bf16.msra.mxu0 0
    %227 = vmatprep.subr.bf16.mxu0 0
    %228 = vmatpush1.bf16.msra.mxu0 0
    %229 = vmatprep.subr.bf16.mxu0 0
    %230 = vmatpush1.bf16.msra.mxu0 0
    %231 = vmatprep.subr.bf16.mxu0 0
    %232 = vmatpush1.bf16.msra.mxu0 0
    %233 = vmatprep.subr.bf16.mxu0 0
    %234 = vmatpush1.bf16.msra.mxu0 0
    %235 = vmatprep.subr.bf16.mxu0 0
    %236 = vmatpush1.bf16.msra.mxu0 0
    %237 = vmatprep.subr.bf16.mxu0 0
    %238 = vmatpush1.bf16.msra.mxu0 0
    %239 = vmatprep.subr.bf16.mxu0 0
    %240 = vmatpush1.bf16.msra.mxu0 0
    %241 = vmatprep.mubr.bf16.mxu0 0
    %242 = vmatmul.mubr.bf16.gmra.mrb[0].mxu0 %v194
    %v243 = vpop.f32.mrb[0].mxu0
    %v244 = vadd.f32 %v140, %v243
    %v245 = vpop.f32.mrb[0].mxu0
    %v246 = vadd.f32 %v144, %v245
    %v247 = vpop.f32.mrb[0].mxu0
    %v248 = vadd.f32 %v140, %v247
    %v249 = vpop.f32.mrb[0].mxu0
    %v250 = vadd.f32 %v144, %v249
    %251 = vdwg.mxu0
    %252 = vmatprep.subr.bf16.mxu0 0
    %253 = vmatpush1.bf16.msra.mxu0 %v179
    %254 = vmatprep.subr.bf16.mxu0 0
    %255 = vmatpush1.bf16.msra.mxu0 %v182
    %256 = vmatprep.subr.bf16.mxu0 0
    %257 = vmatpush1.bf16.msra.mxu0 %v207
    %258 = vmatprep.subr.bf16.mxu0 0
    %259 = vmatpush1.bf16.msra.mxu0 0
    %260 = vmatprep.subr.bf16.mxu0 0
    %261 = vmatpush1.bf16.msra.mxu0 0
    %262 = vmatprep.subr.bf16.mxu0 0
    %263 = vmatpush1.bf16.msra.mxu0 0
    %264 = vmatprep.subr.bf16.mxu0 0
    %265 = vmatpush1.bf16.msra.mxu0 0
    %266 = vmatprep.subr.bf16.mxu0 0
    %267 = vmatpush1.bf16.msra.mxu0 0
    %268 = vmatprep.subr.bf16.mxu0 0
    %269 = vmatpush1.bf16.msra.mxu0 0
    %270 = vmatprep.subr.bf16.mxu0 0
    %271 = vmatpush1.bf16.msra.mxu0 0
    %272 = vmatprep.subr.bf16.mxu0 0
    %273 = vmatpush1.bf16.msra.mxu0 0
    %274 = vmatprep.subr.bf16.mxu0 0
    %275 = vmatpush1.bf16.msra.mxu0 0
    %276 = vmatprep.subr.bf16.mxu0 0
    %277 = vmatpush1.bf16.msra.mxu0 0
    %278 = vmatprep.subr.bf16.mxu0 0
    %279 = vmatpush1.bf16.msra.mxu0 0
    %280 = vmatprep.subr.bf16.mxu0 0
    %281 = vmatpush1.bf16.msra.mxu0 0
    %282 = vmatprep.subr.bf16.mxu0 0
    %283 = vmatpush1.bf16.msra.mxu0 0
    %284 = vmatprep.mubr.bf16.mxu0 0
    %285 = vmatmul.mubr.bf16.gmra.mrb[0].mxu0 %v194
    %v286 = vpop.f32.mrb[0].mxu0
    %v287 = vadd.f32 %v148, %v286
    %v288 = vpop.f32.mrb[0].mxu0
    %v289 = vpop.f32.mrb[0].mxu0
    %v290 = vadd.f32 %v148, %v289
    %v291 = vpop.f32.mrb[0].mxu0
    %292 = vdwg.mxu0
    %v293 = vpack.c.bf16 %v248, %v244
    %v294 = vpack.c.bf16 %v250, %v246
    %v295 = vpack.c.bf16 %v290, %v287
    %v296 = vmax.bf16 %v293, 0
    %v297 = vmax.bf16 %v294, 0
    %v298 = vmax.bf16 %v295, 0
    %v299 = vld [vmem:[#allocation7] sm:$0xff]
    %v300 = vld [vmem:[#allocation7 + $0x8] sm:$0xff]
    %v301 = vld [vmem:[#allocation7 + $0x10] sm:$0xff]
    %v302 = vld [vmem:[#allocation7 + $0x18] sm:$0xff]
    %v303 = vld [vmem:[#allocation7 + $0x20] sm:$0xff]
    %v304 = vld [vmem:[#allocation7 + $0x28] sm:$0xff]
    %v305 = vld [vmem:[#allocation7 + $0x30] sm:$0xff]
    %v306 = vld [vmem:[#allocation7 + $0x38] sm:$0xff]
    %v307 = vld [vmem:[#allocation7 + $0x40] sm:$0xff]
    %v308 = vld [vmem:[#allocation7 + $0x48] sm:$0xff]
    %v309 = vld [vmem:[#allocation7 + $0x50] sm:$0xff]
    %v310 = vld [vmem:[#allocation7 + $0x58] sm:$0xff]
    %v311 = vld [vmem:[#allocation7 + $0x60] sm:$0xff]
    %v312 = vld [vmem:[#allocation7 + $0x68] sm:$0xff]
    %v313 = vld [vmem:[#allocation7 + $0x70] sm:$0xff]
    %v314 = vld [vmem:[#allocation7 + $0x78] sm:$0xff]
    %v315 = vld [vmem:[#allocation7 + $0x80] sm:$0xff]
    %v316 = vld [vmem:[#allocation7 + $0x88] sm:$0xff]
    %v317 = vld [vmem:[#allocation7 + $0x90] sm:$0xff]
    %v318 = vld [vmem:[#allocation7 + $0x98] sm:$0xff]
    %v319 = vld [vmem:[#allocation7 + $0xa0] sm:$0xff]
    %v320 = vld [vmem:[#allocation7 + $0xa8] sm:$0xff]
    %v321 = vld [vmem:[#allocation7 + $0xb0] sm:$0xff]
    %v322 = vld [vmem:[#allocation7 + $0xb8] sm:$0xff]
    %v323 = vld [vmem:[#allocation7 + $0xc0] sm:$0xff]
    %v324 = vld [vmem:[#allocation7 + $0xc8] sm:$0xff]
    %v325 = vld [vmem:[#allocation7 + $0xd0] sm:$0xff]
    %v326 = vld [vmem:[#allocation7 + $0xd8] sm:$0xff]
    %v327 = vld [vmem:[#allocation7 + $0xe0] sm:$0xff]
    %v328 = vld [vmem:[#allocation7 + $0xe8] sm:$0xff]
    %v329 = vld [vmem:[#allocation7 + $0xf0] sm:$0xff]
    %v330 = vld [vmem:[#allocation7 + $0xf8] sm:$0xff]
    %v331 = vld [vmem:[#allocation7 + $0x100] sm:$0xff]
    %v332 = vld [vmem:[#allocation7 + $0x108] sm:$0xff]
    %v333 = vld [vmem:[#allocation7 + $0x110] sm:$0xff]
    %v334 = vld [vmem:[#allocation7 + $0x118] sm:$0xff]
    %v335 = vld [vmem:[#allocation7 + $0x120] sm:$0xff]
    %v336 = vld [vmem:[#allocation7 + $0x128] sm:$0xff]
    %v337 = vld [vmem:[#allocation7 + $0x130] sm:$0xff]
    %v338 = vld [vmem:[#allocation7 + $0x138] sm:$0xff]
    %v339 = vld [vmem:[#allocation7 + $0x140] sm:$0xff]
    %v340 = vld [vmem:[#allocation7 + $0x148] sm:$0xff]
    %v341 = vld [vmem:[#allocation7 + $0x150] sm:$0xff]
    %v342 = vld [vmem:[#allocation7 + $0x158] sm:$0xff]
    %v343 = vld [vmem:[#allocation7 + $0x160] sm:$0xff]
    %v344 = vld [vmem:[#allocation7 + $0x168] sm:$0xff]
    %v345 = vld [vmem:[#allocation7 + $0x170] sm:$0xff]
    %v346 = vld [vmem:[#allocation7 + $0x178] sm:$0xff]
    %v347 = vld [vmem:[#allocation7 + $0x180] sm:$0xff]
    %v348 = vld [vmem:[#allocation7 + $0x188] sm:$0xff]
    %v349 = vld [vmem:[#allocation7 + $0x190] sm:$0xff]
    %v350 = vld [vmem:[#allocation7 + $0x198] sm:$0xff]
    %v351 = vld [vmem:[#allocation7 + $0x1a0] sm:$0xff]
    %v352 = vld [vmem:[#allocation7 + $0x1a8] sm:$0xff]
    %v353 = vld [vmem:[#allocation7 + $0x1b0] sm:$0xff]
    %v354 = vld [vmem:[#allocation7 + $0x1b8] sm:$0xff]
    %v355 = vld [vmem:[#allocation7 + $0x1c0] sm:$0xff]
    %v356 = vld [vmem:[#allocation7 + $0x1c8] sm:$0xff]
    %v357 = vld [vmem:[#allocation7 + $0x1d0] sm:$0xff]
    %v358 = vld [vmem:[#allocation7 + $0x1d8] sm:$0xff]
    %v359 = vld [vmem:[#allocation7 + $0x1e0] sm:$0xff]
    %v360 = vld [vmem:[#allocation7 + $0x1e8] sm:$0xff]
    %v361 = vld [vmem:[#allocation7 + $0x1f0] sm:$0xff]
    %v362 = vld [vmem:[#allocation7 + $0x1f8] sm:$0xff]
    %v363 = vld [vmem:[#allocation7 + $0x200] sm:$0xff]
    %v364 = vld [vmem:[#allocation7 + $0x208] sm:$0xff]
    %v365 = vld [vmem:[#allocation7 + $0x210] sm:$0xff]
    %v366 = vld [vmem:[#allocation7 + $0x218] sm:$0xff]
    %v367 = vld [vmem:[#allocation7 + $0x220] sm:$0xff]
    %v368 = vld [vmem:[#allocation7 + $0x228] sm:$0xff]
    %v369 = vld [vmem:[#allocation7 + $0x230] sm:$0xff]
    %v370 = vld [vmem:[#allocation7 + $0x238] sm:$0xff]
    %v371 = vld [vmem:[#allocation7 + $0x240] sm:$0xff]
    %v372 = vld [vmem:[#allocation7 + $0x248] sm:$0xff]
    %v373 = vld [vmem:[#allocation7 + $0x250] sm:$0xff]
    %v374 = vld [vmem:[#allocation7 + $0x258] sm:$0xff]
    %v375 = vld [vmem:[#allocation7 + $0x260] sm:$0xff]
    %v376 = vld [vmem:[#allocation7 + $0x268] sm:$0xff]
    %v377 = vld [vmem:[#allocation7 + $0x270] sm:$0xff]
    %v378 = vld [vmem:[#allocation7 + $0x278] sm:$0xff]
    %v379 = vld [vmem:[#allocation7 + $0x280] sm:$0xff]
    %v380 = vld [vmem:[#allocation7 + $0x288] sm:$0xff]
    %v381 = vld [vmem:[#allocation7 + $0x290] sm:$0xff]
    %v382 = vld [vmem:[#allocation7 + $0x298] sm:$0xff]
    %v383 = vld [vmem:[#allocation7 + $0x2a0] sm:$0xff]
    %v384 = vld [vmem:[#allocation7 + $0x2a8] sm:$0xff]
    %v385 = vld [vmem:[#allocation7 + $0x2b0] sm:$0xff]
    %v386 = vld [vmem:[#allocation7 + $0x2b8] sm:$0xff]
    %v387 = vld [vmem:[#allocation7 + $0x2c0] sm:$0xff]
    %v388 = vld [vmem:[#allocation7 + $0x2c8] sm:$0xff]
    %v389 = vld [vmem:[#allocation7 + $0x2d0] sm:$0xff]
    %v390 = vld [vmem:[#allocation7 + $0x2d8] sm:$0xff]
    %v391 = vld [vmem:[#allocation7 + $0x2e0] sm:$0xff]
    %v392 = vld [vmem:[#allocation7 + $0x2e8] sm:$0xff]
    %v393 = vld [vmem:[#allocation7 + $0x2f0] sm:$0xff]
    %v394 = vld [vmem:[#allocation7 + $0x2f8] sm:$0xff]
    %v395 = vld [vmem:[%s4] sm:$0xf]
    %v397 = vlaneseq
    %v398 = vshrl.u32 %v397, 7
    %v399 = vsub.s32 0, %v398
    %v400 = vrot.slane %v395, %v399
    %v401 = vlaneseq
    %v402 = vshrl.u32 %v401, 7
    %v403 = vsub.s32 1, %v402
    %v404 = vrot.slane %v395, %v403
    %v405 = vlaneseq
    %v406 = vshrl.u32 %v405, 7
    %v407 = vsub.s32 2, %v406
    %v408 = vrot.slane %v395, %v407
    %v409 = vlaneseq
    %v410 = vshrl.u32 %v409, 7
    %v411 = vsub.s32 3, %v410
    %v412 = vrot.slane %v395, %v411
    %v513 = vunpack.c.l.b16 %v299
    %v514 = vunpack.c.h.b16 %v299
    %v515 = vunpack.c.l.b16 %v300
    %v516 = vunpack.c.h.b16 %v300
    %v517 = vunpack.c.l.b16 %v301
    %v518 = vunpack.c.h.b16 %v301
    %v519 = vunpack.c.l.b16 %v302
    %v520 = vunpack.c.h.b16 %v302
    %v521 = vunpack.c.l.b16 %v303
    %v522 = vunpack.c.h.b16 %v303
    %v523 = vunpack.c.l.b16 %v304
    %v524 = vunpack.c.h.b16 %v304
    %v525 = vunpack.c.l.b16 %v305
    %v526 = vunpack.c.h.b16 %v305
    %v527 = vunpack.c.l.b16 %v306
    %v528 = vunpack.c.h.b16 %v306
    %v529 = vunpack.c.l.b16 %v307
    %v530 = vunpack.c.h.b16 %v307
    %v531 = vunpack.c.l.b16 %v308
    %v532 = vunpack.c.h.b16 %v308
    %v533 = vunpack.c.l.b16 %v309
    %v534 = vunpack.c.h.b16 %v309
    %v535 = vunpack.c.l.b16 %v310
    %v536 = vunpack.c.h.b16 %v310
    %v537 = vunpack.c.l.b16 %v311
    %v538 = vunpack.c.h.b16 %v311
    %v539 = vunpack.c.l.b16 %v312
    %v540 = vunpack.c.h.b16 %v312
    %v541 = vunpack.c.l.b16 %v313
    %v542 = vunpack.c.h.b16 %v313
    %v543 = vunpack.c.l.b16 %v314
    %v544 = vunpack.c.h.b16 %v314
    %v545 = vunpack.c.l.b16 %v315
    %v546 = vunpack.c.h.b16 %v315
    %v547 = vunpack.c.l.b16 %v316
    %v548 = vunpack.c.h.b16 %v316
    %v549 = vunpack.c.l.b16 %v317
    %v550 = vunpack.c.h.b16 %v317
    %v551 = vunpack.c.l.b16 %v318
    %v552 = vunpack.c.h.b16 %v318
    %v553 = vunpack.c.l.b16 %v319
    %v554 = vunpack.c.h.b16 %v319
    %v555 = vunpack.c.l.b16 %v320
    %v556 = vunpack.c.h.b16 %v320
    %v557 = vunpack.c.l.b16 %v321
    %v558 = vunpack.c.h.b16 %v321
    %v559 = vunpack.c.l.b16 %v322
    %v560 = vunpack.c.h.b16 %v322
    %v561 = vunpack.c.l.b16 %v323
    %v562 = vunpack.c.h.b16 %v323
    %v563 = vunpack.c.l.b16 %v324
    %v564 = vunpack.c.h.b16 %v324
    %v565 = vunpack.c.l.b16 %v325
    %v566 = vunpack.c.h.b16 %v325
    %v567 = vunpack.c.l.b16 %v326
    %v568 = vunpack.c.h.b16 %v326
    %v569 = vunpack.c.l.b16 %v327
    %v570 = vunpack.c.h.b16 %v327
    %v571 = vunpack.c.l.b16 %v328
    %v572 = vunpack.c.h.b16 %v328
    %v573 = vunpack.c.l.b16 %v329
    %v574 = vunpack.c.h.b16 %v329
    %v575 = vunpack.c.l.b16 %v330
    %v576 = vunpack.c.h.b16 %v330
    %v577 = vunpack.c.l.b16 %v331
    %v578 = vunpack.c.h.b16 %v331
    %v579 = vunpack.c.l.b16 %v332
    %v580 = vunpack.c.h.b16 %v332
    %v581 = vunpack.c.l.b16 %v333
    %v582 = vunpack.c.h.b16 %v333
    %v583 = vunpack.c.l.b16 %v334
    %v584 = vunpack.c.h.b16 %v334
    %v585 = vunpack.c.l.b16 %v335
    %v586 = vunpack.c.h.b16 %v335
    %v587 = vunpack.c.l.b16 %v336
    %v588 = vunpack.c.h.b16 %v336
    %v589 = vunpack.c.l.b16 %v337
    %v590 = vunpack.c.h.b16 %v337
    %v591 = vunpack.c.l.b16 %v338
    %v592 = vunpack.c.h.b16 %v338
    %v593 = vunpack.c.l.b16 %v339
    %v594 = vunpack.c.h.b16 %v339
    %v595 = vunpack.c.l.b16 %v340
    %v596 = vunpack.c.h.b16 %v340
    %v597 = vunpack.c.l.b16 %v341
    %v598 = vunpack.c.h.b16 %v341
    %v599 = vunpack.c.l.b16 %v342
    %v600 = vunpack.c.h.b16 %v342
    %v601 = vunpack.c.l.b16 %v343
    %v602 = vunpack.c.h.b16 %v343
    %v603 = vunpack.c.l.b16 %v344
    %v604 = vunpack.c.h.b16 %v344
    %v605 = vunpack.c.l.b16 %v345
    %v606 = vunpack.c.h.b16 %v345
    %v607 = vunpack.c.l.b16 %v346
    %v608 = vunpack.c.h.b16 %v346
    %v609 = vunpack.c.l.b16 %v347
    %v610 = vunpack.c.h.b16 %v347
    %v611 = vunpack.c.l.b16 %v348
    %v612 = vunpack.c.h.b16 %v348
    %v613 = vunpack.c.l.b16 %v349
    %v614 = vunpack.c.h.b16 %v349
    %v615 = vunpack.c.l.b16 %v350
    %v616 = vunpack.c.h.b16 %v350
    %v617 = vunpack.c.l.b16 %v351
    %v618 = vunpack.c.h.b16 %v351
    %v619 = vunpack.c.l.b16 %v352
    %v620 = vunpack.c.h.b16 %v352
    %v621 = vunpack.c.l.b16 %v353
    %v622 = vunpack.c.h.b16 %v353
    %v623 = vunpack.c.l.b16 %v354
    %v624 = vunpack.c.h.b16 %v354
    %v625 = vunpack.c.l.b16 %v355
    %v626 = vunpack.c.h.b16 %v355
    %v627 = vunpack.c.l.b16 %v356
    %v628 = vunpack.c.h.b16 %v356
    %v629 = vunpack.c.l.b16 %v357
    %v630 = vunpack.c.h.b16 %v357
    %v631 = vunpack.c.l.b16 %v358
    %v632 = vunpack.c.h.b16 %v358
    %v633 = vunpack.c.l.b16 %v359
    %v634 = vunpack.c.h.b16 %v359
    %v635 = vunpack.c.l.b16 %v360
    %v636 = vunpack.c.h.b16 %v360
    %v637 = vunpack.c.l.b16 %v361
    %v638 = vunpack.c.h.b16 %v361
    %v639 = vunpack.c.l.b16 %v362
    %v640 = vunpack.c.h.b16 %v362
    %v641 = vunpack.c.l.b16 %v363
    %v642 = vunpack.c.h.b16 %v363
    %v643 = vunpack.c.l.b16 %v364
    %v644 = vunpack.c.h.b16 %v364
    %v645 = vunpack.c.l.b16 %v365
    %v646 = vunpack.c.h.b16 %v365
    %v647 = vunpack.c.l.b16 %v366
    %v648 = vunpack.c.h.b16 %v366
    %v649 = vunpack.c.l.b16 %v367
    %v650 = vunpack.c.h.b16 %v367
    %v651 = vunpack.c.l.b16 %v368
    %v652 = vunpack.c.h.b16 %v368
    %v653 = vunpack.c.l.b16 %v369
    %v654 = vunpack.c.h.b16 %v369
    %v655 = vunpack.c.l.b16 %v370
    %v656 = vunpack.c.h.b16 %v370
    %v657 = vunpack.c.l.b16 %v371
    %v658 = vunpack.c.h.b16 %v371
    %v659 = vunpack.c.l.b16 %v372
    %v660 = vunpack.c.h.b16 %v372
    %v661 = vunpack.c.l.b16 %v373
    %v662 = vunpack.c.h.b16 %v373
    %v663 = vunpack.c.l.b16 %v374
    %v664 = vunpack.c.h.b16 %v374
    %v665 = vunpack.c.l.b16 %v375
    %v666 = vunpack.c.h.b16 %v375
    %v667 = vunpack.c.l.b16 %v376
    %v668 = vunpack.c.h.b16 %v376
    %v669 = vunpack.c.l.b16 %v377
    %v670 = vunpack.c.h.b16 %v377
    %v671 = vunpack.c.l.b16 %v378
    %v672 = vunpack.c.h.b16 %v378
    %v673 = vunpack.c.l.b16 %v379
    %v674 = vunpack.c.h.b16 %v379
    %v675 = vunpack.c.l.b16 %v380
    %v676 = vunpack.c.h.b16 %v380
    %v677 = vunpack.c.l.b16 %v381
    %v678 = vunpack.c.h.b16 %v381
    %v679 = vunpack.c.l.b16 %v382
    %v680 = vunpack.c.h.b16 %v382
    %v681 = vunpack.c.l.b16 %v383
    %v682 = vunpack.c.h.b16 %v383
    %v683 = vunpack.c.l.b16 %v384
    %v684 = vunpack.c.h.b16 %v384
    %v685 = vunpack.c.l.b16 %v385
    %v686 = vunpack.c.h.b16 %v385
    %v687 = vunpack.c.l.b16 %v386
    %v688 = vunpack.c.h.b16 %v386
    %v689 = vunpack.c.l.b16 %v387
    %v690 = vunpack.c.h.b16 %v387
    %v691 = vunpack.c.l.b16 %v388
    %v692 = vunpack.c.h.b16 %v388
    %v693 = vunpack.c.l.b16 %v389
    %v694 = vunpack.c.h.b16 %v389
    %v695 = vunpack.c.l.b16 %v390
    %v696 = vunpack.c.h.b16 %v390
    %v697 = vunpack.c.l.b16 %v391
    %v698 = vunpack.c.h.b16 %v391
    %v699 = vunpack.c.l.b16 %v392
    %v700 = vunpack.c.h.b16 %v392
    %v701 = vunpack.c.l.b16 %v393
    %v702 = vunpack.c.h.b16 %v393
    %v703 = vunpack.c.l.b16 %v394
    %v704 = vunpack.c.h.b16 %v394
    %v705 = vpack.c.b16 %v517, %v513
    %v706 = vpack.c.b16 %v518, %v514
    %v707 = vpack.c.b16 %v519, %v515
    %v708 = vpack.c.b16 %v520, %v516
    %v709 = vpack.c.b16 %v525, %v521
    %v710 = vpack.c.b16 %v526, %v522
    %v711 = vpack.c.b16 %v527, %v523
    %v712 = vpack.c.b16 %v528, %v524
    %v713 = vpack.c.b16 %v533, %v529
    %v714 = vpack.c.b16 %v534, %v530
    %v715 = vpack.c.b16 %v535, %v531
    %v716 = vpack.c.b16 %v536, %v532
    %v717 = vpack.c.b16 %v541, %v537
    %v718 = vpack.c.b16 %v542, %v538
    %v719 = vpack.c.b16 %v543, %v539
    %v720 = vpack.c.b16 %v544, %v540
    %v721 = vpack.c.b16 %v549, %v545
    %v722 = vpack.c.b16 %v550, %v546
    %v723 = vpack.c.b16 %v551, %v547
    %v724 = vpack.c.b16 %v552, %v548
    %v725 = vpack.c.b16 %v557, %v553
    %v726 = vpack.c.b16 %v558, %v554
    %v727 = vpack.c.b16 %v559, %v555
    %v728 = vpack.c.b16 %v560, %v556
    %v729 = vpack.c.b16 %v565, %v561
    %v730 = vpack.c.b16 %v566, %v562
    %v731 = vpack.c.b16 %v567, %v563
    %v732 = vpack.c.b16 %v568, %v564
    %v733 = vpack.c.b16 %v573, %v569
    %v734 = vpack.c.b16 %v574, %v570
    %v735 = vpack.c.b16 %v575, %v571
    %v736 = vpack.c.b16 %v576, %v572
    %v737 = vpack.c.b16 %v581, %v577
    %v738 = vpack.c.b16 %v582, %v578
    %v739 = vpack.c.b16 %v583, %v579
    %v740 = vpack.c.b16 %v584, %v580
    %v741 = vpack.c.b16 %v589, %v585
    %v742 = vpack.c.b16 %v590, %v586
    %v743 = vpack.c.b16 %v591, %v587
    %v744 = vpack.c.b16 %v592, %v588
    %v745 = vpack.c.b16 %v597, %v593
    %v746 = vpack.c.b16 %v598, %v594
    %v747 = vpack.c.b16 %v599, %v595
    %v748 = vpack.c.b16 %v600, %v596
    %v749 = vpack.c.b16 %v605, %v601
    %v750 = vpack.c.b16 %v606, %v602
    %v751 = vpack.c.b16 %v607, %v603
    %v752 = vpack.c.b16 %v608, %v604
    %v753 = vpack.c.b16 %v613, %v609
    %v754 = vpack.c.b16 %v614, %v610
    %v755 = vpack.c.b16 %v615, %v611
    %v756 = vpack.c.b16 %v616, %v612
    %v757 = vpack.c.b16 %v621, %v617
    %v758 = vpack.c.b16 %v622, %v618
    %v759 = vpack.c.b16 %v623, %v619
    %v760 = vpack.c.b16 %v624, %v620
    %v761 = vpack.c.b16 %v629, %v625
    %v762 = vpack.c.b16 %v630, %v626
    %v763 = vpack.c.b16 %v631, %v627
    %v764 = vpack.c.b16 %v632, %v628
    %v765 = vpack.c.b16 %v637, %v633
    %v766 = vpack.c.b16 %v638, %v634
    %v767 = vpack.c.b16 %v639, %v635
    %v768 = vpack.c.b16 %v640, %v636
    %v769 = vpack.c.b16 %v645, %v641
    %v770 = vpack.c.b16 %v646, %v642
    %v771 = vpack.c.b16 %v647, %v643
    %v772 = vpack.c.b16 %v648, %v644
    %v773 = vpack.c.b16 %v653, %v649
    %v774 = vpack.c.b16 %v654, %v650
    %v775 = vpack.c.b16 %v655, %v651
    %v776 = vpack.c.b16 %v656, %v652
    %v777 = vpack.c.b16 %v661, %v657
    %v778 = vpack.c.b16 %v662, %v658
    %v779 = vpack.c.b16 %v663, %v659
    %v780 = vpack.c.b16 %v664, %v660
    %v781 = vpack.c.b16 %v669, %v665
    %v782 = vpack.c.b16 %v670, %v666
    %v783 = vpack.c.b16 %v671, %v667
    %v784 = vpack.c.b16 %v672, %v668
    %v785 = vpack.c.b16 %v677, %v673
    %v786 = vpack.c.b16 %v678, %v674
    %v787 = vpack.c.b16 %v679, %v675
    %v788 = vpack.c.b16 %v680, %v676
    %v789 = vpack.c.b16 %v685, %v681
    %v790 = vpack.c.b16 %v686, %v682
    %v791 = vpack.c.b16 %v687, %v683
    %v792 = vpack.c.b16 %v688, %v684
    %v793 = vpack.c.b16 %v693, %v689
    %v794 = vpack.c.b16 %v694, %v690
    %v795 = vpack.c.b16 %v695, %v691
    %v796 = vpack.c.b16 %v696, %v692
    %v797 = vpack.c.b16 %v701, %v697
    %v798 = vpack.c.b16 %v702, %v698
    %v799 = vpack.c.b16 %v703, %v699
    %v800 = vpack.c.b16 %v704, %v700
    %897 = vmatprep.subr.bf16.mxu0 %v706
    %898 = vmatpush1.bf16.msra.mxu0 %v705
    %899 = vmatprep.subr.bf16.mxu0 %v710
    %900 = vmatpush1.bf16.msra.mxu0 %v709
    %901 = vmatprep.subr.bf16.mxu0 %v714
    %902 = vmatpush1.bf16.msra.mxu0 %v713
    %903 = vmatprep.subr.bf16.mxu0 %v718
    %904 = vmatpush1.bf16.msra.mxu0 %v717
    %905 = vmatprep.subr.bf16.mxu0 %v722
    %906 = vmatpush1.bf16.msra.mxu0 %v721
    %907 = vmatprep.subr.bf16.mxu0 %v726
    %908 = vmatpush1.bf16.msra.mxu0 %v725
    %909 = vmatprep.subr.bf16.mxu0 %v730
    %910 = vmatpush1.bf16.msra.mxu0 %v729
    %911 = vmatprep.subr.bf16.mxu0 %v734
    %912 = vmatpush1.bf16.msra.mxu0 %v733
    %913 = vmatprep.subr.bf16.mxu0 %v738
    %914 = vmatpush1.bf16.msra.mxu0 %v737
    %915 = vmatprep.subr.bf16.mxu0 %v742
    %916 = vmatpush1.bf16.msra.mxu0 %v741
    %917 = vmatprep.subr.bf16.mxu0 %v746
    %918 = vmatpush1.bf16.msra.mxu0 %v745
    %919 = vmatprep.subr.bf16.mxu0 %v750
    %920 = vmatpush1.bf16.msra.mxu0 %v749
    %921 = vmatprep.subr.bf16.mxu0 %v754
    %922 = vmatpush1.bf16.msra.mxu0 %v753
    %923 = vmatprep.subr.bf16.mxu0 %v758
    %924 = vmatpush1.bf16.msra.mxu0 %v757
    %925 = vmatprep.subr.bf16.mxu0 %v762
    %926 = vmatpush1.bf16.msra.mxu0 %v761
    %927 = vmatprep.subr.bf16.mxu0 %v766
    %928 = vmatpush1.bf16.msra.mxu0 %v765
    %929 = vmatprep.mubr.bf16.mxu0 %v297
    %930 = vmatmul.mubr.bf16.gmra.mrb[0].mxu0 %v296
    %v931 = vpop.f32.mrb[0].mxu0
    %v932 = vadd.f32 %v400, %v931
    %v933 = vpop.f32.mrb[0].mxu0
    %v934 = vadd.f32 %v404, %v933
    %v935 = vpop.f32.mrb[0].mxu0
    %v936 = vadd.f32 %v400, %v935
    %v937 = vpop.f32.mrb[0].mxu0
    %v938 = vadd.f32 %v404, %v937
    %939 = vdwg.mxu0
    %940 = vmatprep.subr.bf16.mxu0 %v770
    %941 = vmatpush1.bf16.msra.mxu0 %v769
    %942 = vmatprep.subr.bf16.mxu0 %v774
    %943 = vmatpush1.bf16.msra.mxu0 %v773
    %944 = vmatprep.subr.bf16.mxu0 %v778
    %945 = vmatpush1.bf16.msra.mxu0 %v777
    %946 = vmatprep.subr.bf16.mxu0 %v782
    %947 = vmatpush1.bf16.msra.mxu0 %v781
    %948 = vmatprep.subr.bf16.mxu0 %v786
    %949 = vmatpush1.bf16.msra.mxu0 %v785
    %950 = vmatprep.subr.bf16.mxu0 %v790
    %951 = vmatpush1.bf16.msra.mxu0 %v789
    %952 = vmatprep.subr.bf16.mxu0 %v794
    %953 = vmatpush1.bf16.msra.mxu0 %v793
    %954 = vmatprep.subr.bf16.mxu0 %v798
    %955 = vmatpush1.bf16.msra.mxu0 %v797
    %956 = vmatprep.subr.bf16.mxu0 0
    %957 = vmatpush1.bf16.msra.mxu0 0
    %958 = vmatprep.subr.bf16.mxu0 0
    %959 = vmatpush1.bf16.msra.mxu0 0
    %960 = vmatprep.subr.bf16.mxu0 0
    %961 = vmatpush1.bf16.msra.mxu0 0
    %962 = vmatprep.subr.bf16.mxu0 0
    %963 = vmatpush1.bf16.msra.mxu0 0
    %964 = vmatprep.subr.bf16.mxu0 0
    %965 = vmatpush1.bf16.msra.mxu0 0
    %966 = vmatprep.subr.bf16.mxu0 0
    %967 = vmatpush1.bf16.msra.mxu0 0
    %968 = vmatprep.subr.bf16.mxu0 0
    %969 = vmatpush1.bf16.msra.mxu0 0
    %970 = vmatprep.subr.bf16.mxu0 0
    %971 = vmatpush1.bf16.msra.mxu0 0
    %972 = vmatprep.mubr.bf16.mxu0 0
    %973 = vmatmul.mubr.bf16.gmra.mrb[0].mxu0 %v298
    %v974 = vpop.f32.mrb[0].mxu0
    %v975 = vadd.f32 %v932, %v974
    %v976 = vpop.f32.mrb[0].mxu0
    %v977 = vadd.f32 %v934, %v976
    %v978 = vpop.f32.mrb[0].mxu0
    %v979 = vadd.f32 %v936, %v978
    %v980 = vpop.f32.mrb[0].mxu0
    %v981 = vadd.f32 %v938, %v980
    %982 = vdwg.mxu0
    %983 = vmatprep.subr.bf16.mxu0 %v708
    %984 = vmatpush1.bf16.msra.mxu0 %v707
    %985 = vmatprep.subr.bf16.mxu0 %v712
    %986 = vmatpush1.bf16.msra.mxu0 %v711
    %987 = vmatprep.subr.bf16.mxu0 %v716
    %988 = vmatpush1.bf16.msra.mxu0 %v715
    %989 = vmatprep.subr.bf16.mxu0 %v720
    %990 = vmatpush1.bf16.msra.mxu0 %v719
    %991 = vmatprep.subr.bf16.mxu0 %v724
    %992 = vmatpush1.bf16.msra.mxu0 %v723
    %993 = vmatprep.subr.bf16.mxu0 %v728
    %994 = vmatpush1.bf16.msra.mxu0 %v727
    %995 = vmatprep.subr.bf16.mxu0 %v732
    %996 = vmatpush1.bf16.msra.mxu0 %v731
    %997 = vmatprep.subr.bf16.mxu0 %v736
    %998 = vmatpush1.bf16.msra.mxu0 %v735
    %999 = vmatprep.subr.bf16.mxu0 %v740
    %1000 = vmatpush1.bf16.msra.mxu0 %v739
    %1001 = vmatprep.subr.bf16.mxu0 %v744
    %1002 = vmatpush1.bf16.msra.mxu0 %v743
    %1003 = vmatprep.subr.bf16.mxu0 %v748
    %1004 = vmatpush1.bf16.msra.mxu0 %v747
    %1005 = vmatprep.subr.bf16.mxu0 %v752
    %1006 = vmatpush1.bf16.msra.mxu0 %v751
    %1007 = vmatprep.subr.bf16.mxu0 %v756
    %1008 = vmatpush1.bf16.msra.mxu0 %v755
    %1009 = vmatprep.subr.bf16.mxu0 %v760
    %1010 = vmatpush1.bf16.msra.mxu0 %v759
    %1011 = vmatprep.subr.bf16.mxu0 %v764
    %1012 = vmatpush1.bf16.msra.mxu0 %v763
    %1013 = vmatprep.subr.bf16.mxu0 %v768
    %1014 = vmatpush1.bf16.msra.mxu0 %v767
    %1015 = vmatprep.mubr.bf16.mxu0 %v297
    %1016 = vmatmul.mubr.bf16.gmra.mrb[0].mxu0 %v296
    %v1017 = vpop.f32.mrb[0].mxu0
    %v1018 = vadd.f32 %v408, %v1017
    %v1019 = vpop.f32.mrb[0].mxu0
    %v1020 = vadd.f32 %v412, %v1019
    %v1021 = vpop.f32.mrb[0].mxu0
    %v1022 = vadd.f32 %v408, %v1021
    %v1023 = vpop.f32.mrb[0].mxu0
    %v1024 = vadd.f32 %v412, %v1023
    %1025 = vdwg.mxu0
    %1026 = vmatprep.subr.bf16.mxu0 %v772
    %1027 = vmatpush1.bf16.msra.mxu0 %v771
    %1028 = vmatprep.subr.bf16.mxu0 %v776
    %1029 = vmatpush1.bf16.msra.mxu0 %v775
    %1030 = vmatprep.subr.bf16.mxu0 %v780
    %1031 = vmatpush1.bf16.msra.mxu0 %v779
    %1032 = vmatprep.subr.bf16.mxu0 %v784
    %1033 = vmatpush1.bf16.msra.mxu0 %v783
    %1034 = vmatprep.subr.bf16.mxu0 %v788
    %1035 = vmatpush1.bf16.msra.mxu0 %v787
    %1036 = vmatprep.subr.bf16.mxu0 %v792
    %1037 = vmatpush1.bf16.msra.mxu0 %v791
    %1038 = vmatprep.subr.bf16.mxu0 %v796
    %1039 = vmatpush1.bf16.msra.mxu0 %v795
    %1040 = vmatprep.subr.bf16.mxu0 %v800
    %1041 = vmatpush1.bf16.msra.mxu0 %v799
    %1042 = vmatprep.subr.bf16.mxu0 0
    %1043 = vmatpush1.bf16.msra.mxu0 0
    %1044 = vmatprep.subr.bf16.mxu0 0
    %1045 = vmatpush1.bf16.msra.mxu0 0
    %1046 = vmatprep.subr.bf16.mxu0 0
    %1047 = vmatpush1.bf16.msra.mxu0 0
    %1048 = vmatprep.subr.bf16.mxu0 0
    %1049 = vmatpush1.bf16.msra.mxu0 0
    %1050 = vmatprep.subr.bf16.mxu0 0
    %1051 = vmatpush1.bf16.msra.mxu0 0
    %1052 = vmatprep.subr.bf16.mxu0 0
    %1053 = vmatpush1.bf16.msra.mxu0 0
    %1054 = vmatprep.subr.bf16.mxu0 0
    %1055 = vmatpush1.bf16.msra.mxu0 0
    %1056 = vmatprep.subr.bf16.mxu0 0
    %1057 = vmatpush1.bf16.msra.mxu0 0
    %1058 = vmatprep.mubr.bf16.mxu0 0
    %1059 = vmatmul.mubr.bf16.gmra.mrb[0].mxu0 %v298
    %v1060 = vpop.f32.mrb[0].mxu0
    %v1061 = vadd.f32 %v1018, %v1060
    %v1062 = vpop.f32.mrb[0].mxu0
    %v1063 = vadd.f32 %v1020, %v1062
    %v1064 = vpop.f32.mrb[0].mxu0
    %v1065 = vadd.f32 %v1022, %v1064
    %v1066 = vpop.f32.mrb[0].mxu0
    %v1067 = vadd.f32 %v1024, %v1066
    %1068 = vdwg.mxu0
    %v1069 = vpack.c.bf16 %v979, %v975
    %v1070 = vpack.c.bf16 %v981, %v977
    %v1071 = vpack.c.bf16 %v1065, %v1061
    %v1072 = vpack.c.bf16 %v1067, %v1063
    %v1073 = vmax.bf16 %v1069, 0
    %v1074 = vmax.bf16 %v1070, 0
    %v1075 = vmax.bf16 %v1071, 0
    %v1076 = vmax.bf16 %v1072, 0
    %v1077 = vld [vmem:[#allocation8] sm:$0xff]
    %v1078 = vld [vmem:[#allocation8 + $0x8] sm:$0xff]
    %v1079 = vld [vmem:[#allocation8 + $0x10] sm:$0xff]
    %v1080 = vld [vmem:[#allocation8 + $0x18] sm:$0xff]
    %v1081 = vld [vmem:[#allocation8 + $0x20] sm:$0xff]
    %v1082 = vld [vmem:[#allocation8 + $0x28] sm:$0xff]
    %v1083 = vld [vmem:[#allocation8 + $0x30] sm:$0xff]
    %v1084 = vld [vmem:[#allocation8 + $0x38] sm:$0xff]
    %v1085 = vld [vmem:[#allocation8 + $0x40] sm:$0xff]
    %v1086 = vld [vmem:[#allocation8 + $0x48] sm:$0xff]
    %v1087 = vld [vmem:[#allocation8 + $0x50] sm:$0xff]
    %v1088 = vld [vmem:[#allocation8 + $0x58] sm:$0xff]
    %v1089 = vld [vmem:[#allocation8 + $0x60] sm:$0xff]
    %v1090 = vld [vmem:[#allocation8 + $0x68] sm:$0xff]
    %v1091 = vld [vmem:[#allocation8 + $0x70] sm:$0xff]
    %v1092 = vld [vmem:[#allocation8 + $0x78] sm:$0xff]
    %v1093 = vld [vmem:[#allocation8 + $0x80] sm:$0xff]
    %v1094 = vld [vmem:[#allocation8 + $0x88] sm:$0xff]
    %v1095 = vld [vmem:[#allocation8 + $0x90] sm:$0xff]
    %v1096 = vld [vmem:[#allocation8 + $0x98] sm:$0xff]
    %v1097 = vld [vmem:[#allocation8 + $0xa0] sm:$0xff]
    %v1098 = vld [vmem:[#allocation8 + $0xa8] sm:$0xff]
    %v1099 = vld [vmem:[#allocation8 + $0xb0] sm:$0xff]
    %v1100 = vld [vmem:[#allocation8 + $0xb8] sm:$0xff]
    %v1101 = vld [vmem:[#allocation8 + $0xc0] sm:$0xff]
    %v1102 = vld [vmem:[#allocation8 + $0xc8] sm:$0xff]
    %v1103 = vld [vmem:[#allocation8 + $0xd0] sm:$0xff]
    %v1104 = vld [vmem:[#allocation8 + $0xd8] sm:$0xff]
    %v1105 = vld [vmem:[#allocation8 + $0xe0] sm:$0xff]
    %v1106 = vld [vmem:[#allocation8 + $0xe8] sm:$0xff]
    %v1107 = vld [vmem:[#allocation8 + $0xf0] sm:$0xff]
    %v1108 = vld [vmem:[#allocation8 + $0xf8] sm:$0xff]
    %v1109 = vld [vmem:[#allocation8 + $0x100] sm:$0xff]
    %v1110 = vld [vmem:[#allocation8 + $0x108] sm:$0xff]
    %v1111 = vld [vmem:[#allocation8 + $0x110] sm:$0xff]
    %v1112 = vld [vmem:[#allocation8 + $0x118] sm:$0xff]
    %v1113 = vld [vmem:[#allocation8 + $0x120] sm:$0xff]
    %v1114 = vld [vmem:[#allocation8 + $0x128] sm:$0xff]
    %v1115 = vld [vmem:[#allocation8 + $0x130] sm:$0xff]
    %v1116 = vld [vmem:[#allocation8 + $0x138] sm:$0xff]
    %v1117 = vld [vmem:[#allocation8 + $0x140] sm:$0xff]
    %v1118 = vld [vmem:[#allocation8 + $0x148] sm:$0xff]
    %v1119 = vld [vmem:[#allocation8 + $0x150] sm:$0xff]
    %v1120 = vld [vmem:[#allocation8 + $0x158] sm:$0xff]
    %v1121 = vld [vmem:[#allocation8 + $0x160] sm:$0xff]
    %v1122 = vld [vmem:[#allocation8 + $0x168] sm:$0xff]
    %v1123 = vld [vmem:[#allocation8 + $0x170] sm:$0xff]
    %v1124 = vld [vmem:[#allocation8 + $0x178] sm:$0xff]
    %v1125 = vld [vmem:[#allocation8 + $0x180] sm:$0xff]
    %v1126 = vld [vmem:[#allocation8 + $0x188] sm:$0xff]
    %v1127 = vld [vmem:[#allocation8 + $0x190] sm:$0xff]
    %v1128 = vld [vmem:[#allocation8 + $0x198] sm:$0xff]
    %v1129 = vld [vmem:[#allocation8 + $0x1a0] sm:$0xff]
    %v1130 = vld [vmem:[#allocation8 + $0x1a8] sm:$0xff]
    %v1131 = vld [vmem:[#allocation8 + $0x1b0] sm:$0xff]
    %v1132 = vld [vmem:[#allocation8 + $0x1b8] sm:$0xff]
    %v1133 = vld [vmem:[#allocation8 + $0x1c0] sm:$0xff]
    %v1134 = vld [vmem:[#allocation8 + $0x1c8] sm:$0xff]
    %v1135 = vld [vmem:[#allocation8 + $0x1d0] sm:$0xff]
    %v1136 = vld [vmem:[#allocation8 + $0x1d8] sm:$0xff]
    %v1137 = vld [vmem:[#allocation8 + $0x1e0] sm:$0xff]
    %v1138 = vld [vmem:[#allocation8 + $0x1e8] sm:$0xff]
    %v1139 = vld [vmem:[#allocation8 + $0x1f0] sm:$0xff]
    %v1140 = vld [vmem:[#allocation8 + $0x1f8] sm:$0xff]
    %v1141 = vld [vmem:[#allocation8 + $0x200] sm:$0xff]
    %v1142 = vld [vmem:[#allocation8 + $0x208] sm:$0xff]
    %v1143 = vld [vmem:[#allocation8 + $0x210] sm:$0xff]
    %v1144 = vld [vmem:[#allocation8 + $0x218] sm:$0xff]
    %v1145 = vld [vmem:[#allocation8 + $0x220] sm:$0xff]
    %v1146 = vld [vmem:[#allocation8 + $0x228] sm:$0xff]
    %v1147 = vld [vmem:[#allocation8 + $0x230] sm:$0xff]
    %v1148 = vld [vmem:[#allocation8 + $0x238] sm:$0xff]
    %v1149 = vld [vmem:[#allocation8 + $0x240] sm:$0xff]
    %v1150 = vld [vmem:[#allocation8 + $0x248] sm:$0xff]
    %v1151 = vld [vmem:[#allocation8 + $0x250] sm:$0xff]
    %v1152 = vld [vmem:[#allocation8 + $0x258] sm:$0xff]
    %v1153 = vld [vmem:[#allocation8 + $0x260] sm:$0xff]
    %v1154 = vld [vmem:[#allocation8 + $0x268] sm:$0xff]
    %v1155 = vld [vmem:[#allocation8 + $0x270] sm:$0xff]
    %v1156 = vld [vmem:[#allocation8 + $0x278] sm:$0xff]
    %v1157 = vld [vmem:[#allocation8 + $0x280] sm:$0xff]
    %v1158 = vld [vmem:[#allocation8 + $0x288] sm:$0xff]
    %v1159 = vld [vmem:[#allocation8 + $0x290] sm:$0xff]
    %v1160 = vld [vmem:[#allocation8 + $0x298] sm:$0xff]
    %v1161 = vld [vmem:[#allocation8 + $0x2a0] sm:$0xff]
    %v1162 = vld [vmem:[#allocation8 + $0x2a8] sm:$0xff]
    %v1163 = vld [vmem:[#allocation8 + $0x2b0] sm:$0xff]
    %v1164 = vld [vmem:[#allocation8 + $0x2b8] sm:$0xff]
    %v1165 = vld [vmem:[#allocation8 + $0x2c0] sm:$0xff]
    %v1166 = vld [vmem:[#allocation8 + $0x2c8] sm:$0xff]
    %v1167 = vld [vmem:[#allocation8 + $0x2d0] sm:$0xff]
    %v1168 = vld [vmem:[#allocation8 + $0x2d8] sm:$0xff]
    %v1169 = vld [vmem:[#allocation8 + $0x2e0] sm:$0xff]
    %v1170 = vld [vmem:[#allocation8 + $0x2e8] sm:$0xff]
    %v1171 = vld [vmem:[#allocation8 + $0x2f0] sm:$0xff]
    %v1172 = vld [vmem:[#allocation8 + $0x2f8] sm:$0xff]
    %v1173 = vld [vmem:[#allocation8 + $0x300] sm:$0xff]
    %v1174 = vld [vmem:[#allocation8 + $0x308] sm:$0xff]
    %v1175 = vld [vmem:[#allocation8 + $0x310] sm:$0xff]
    %v1176 = vld [vmem:[#allocation8 + $0x318] sm:$0xff]
    %v1177 = vld [vmem:[#allocation8 + $0x320] sm:$0xff]
    %v1178 = vld [vmem:[#allocation8 + $0x328] sm:$0xff]
    %v1179 = vld [vmem:[#allocation8 + $0x330] sm:$0xff]
    %v1180 = vld [vmem:[#allocation8 + $0x338] sm:$0xff]
    %v1181 = vld [vmem:[#allocation8 + $0x340] sm:$0xff]
    %v1182 = vld [vmem:[#allocation8 + $0x348] sm:$0xff]
    %v1183 = vld [vmem:[#allocation8 + $0x350] sm:$0xff]
    %v1184 = vld [vmem:[#allocation8 + $0x358] sm:$0xff]
    %v1185 = vld [vmem:[#allocation8 + $0x360] sm:$0xff]
    %v1186 = vld [vmem:[#allocation8 + $0x368] sm:$0xff]
    %v1187 = vld [vmem:[#allocation8 + $0x370] sm:$0xff]
    %v1188 = vld [vmem:[#allocation8 + $0x378] sm:$0xff]
    %v1189 = vld [vmem:[#allocation8 + $0x380] sm:$0xff]
    %v1190 = vld [vmem:[#allocation8 + $0x388] sm:$0xff]
    %v1191 = vld [vmem:[#allocation8 + $0x390] sm:$0xff]
    %v1192 = vld [vmem:[#allocation8 + $0x398] sm:$0xff]
    %v1193 = vld [vmem:[#allocation8 + $0x3a0] sm:$0xff]
    %v1194 = vld [vmem:[#allocation8 + $0x3a8] sm:$0xff]
    %v1195 = vld [vmem:[#allocation8 + $0x3b0] sm:$0xff]
    %v1196 = vld [vmem:[#allocation8 + $0x3b8] sm:$0xff]
    %v1197 = vld [vmem:[#allocation8 + $0x3c0] sm:$0xff]
    %v1198 = vld [vmem:[#allocation8 + $0x3c8] sm:$0xff]
    %v1199 = vld [vmem:[#allocation8 + $0x3d0] sm:$0xff]
    %v1200 = vld [vmem:[#allocation8 + $0x3d8] sm:$0xff]
    %v1201 = vld [vmem:[#allocation8 + $0x3e0] sm:$0xff]
    %v1202 = vld [vmem:[#allocation8 + $0x3e8] sm:$0xff]
    %v1203 = vld [vmem:[#allocation8 + $0x3f0] sm:$0xff]
    %v1204 = vld [vmem:[#allocation8 + $0x3f8] sm:$0xff]
    %v1205 = vld [vmem:[%s6] sm:$0xf]
    %v1207 = vlaneseq
    %v1208 = vshrl.u32 %v1207, 7
    %v1209 = vsub.s32 0, %v1208
    %v1210 = vrot.slane %v1205, %v1209
    %v1211 = vlaneseq
    %v1212 = vshrl.u32 %v1211, 7
    %v1213 = vsub.s32 1, %v1212
    %v1214 = vrot.slane %v1205, %v1213
    %v1215 = vlaneseq
    %v1216 = vshrl.u32 %v1215, 7
    %v1217 = vsub.s32 2, %v1216
    %v1218 = vrot.slane %v1205, %v1217
    %v1219 = vlaneseq
    %v1220 = vshrl.u32 %v1219, 7
    %v1221 = vsub.s32 3, %v1220
    %v1222 = vrot.slane %v1205, %v1221
    %v1355 = vunpack.c.l.b16 %v1077
    %v1356 = vunpack.c.h.b16 %v1077
    %v1357 = vunpack.c.l.b16 %v1078
    %v1358 = vunpack.c.h.b16 %v1078
    %v1359 = vunpack.c.l.b16 %v1079
    %v1360 = vunpack.c.h.b16 %v1079
    %v1361 = vunpack.c.l.b16 %v1080
    %v1362 = vunpack.c.h.b16 %v1080
    %v1363 = vunpack.c.l.b16 %v1081
    %v1364 = vunpack.c.h.b16 %v1081
    %v1365 = vunpack.c.l.b16 %v1082
    %v1366 = vunpack.c.h.b16 %v1082
    %v1367 = vunpack.c.l.b16 %v1083
    %v1368 = vunpack.c.h.b16 %v1083
    %v1369 = vunpack.c.l.b16 %v1084
    %v1370 = vunpack.c.h.b16 %v1084
    %v1371 = vunpack.c.l.b16 %v1085
    %v1372 = vunpack.c.h.b16 %v1085
    %v1373 = vunpack.c.l.b16 %v1086
    %v1374 = vunpack.c.h.b16 %v1086
    %v1375 = vunpack.c.l.b16 %v1087
    %v1376 = vunpack.c.h.b16 %v1087
    %v1377 = vunpack.c.l.b16 %v1088
    %v1378 = vunpack.c.h.b16 %v1088
    %v1379 = vunpack.c.l.b16 %v1089
    %v1380 = vunpack.c.h.b16 %v1089
    %v1381 = vunpack.c.l.b16 %v1090
    %v1382 = vunpack.c.h.b16 %v1090
    %v1383 = vunpack.c.l.b16 %v1091
    %v1384 = vunpack.c.h.b16 %v1091
    %v1385 = vunpack.c.l.b16 %v1092
    %v1386 = vunpack.c.h.b16 %v1092
    %v1387 = vunpack.c.l.b16 %v1093
    %v1388 = vunpack.c.h.b16 %v1093
    %v1389 = vunpack.c.l.b16 %v1094
    %v1390 = vunpack.c.h.b16 %v1094
    %v1391 = vunpack.c.l.b16 %v1095
    %v1392 = vunpack.c.h.b16 %v1095
    %v1393 = vunpack.c.l.b16 %v1096
    %v1394 = vunpack.c.h.b16 %v1096
    %v1395 = vunpack.c.l.b16 %v1097
    %v1396 = vunpack.c.h.b16 %v1097
    %v1397 = vunpack.c.l.b16 %v1098
    %v1398 = vunpack.c.h.b16 %v1098
    %v1399 = vunpack.c.l.b16 %v1099
    %v1400 = vunpack.c.h.b16 %v1099
    %v1401 = vunpack.c.l.b16 %v1100
    %v1402 = vunpack.c.h.b16 %v1100
    %v1403 = vunpack.c.l.b16 %v1101
    %v1404 = vunpack.c.h.b16 %v1101
    %v1405 = vunpack.c.l.b16 %v1102
    %v1406 = vunpack.c.h.b16 %v1102
    %v1407 = vunpack.c.l.b16 %v1103
    %v1408 = vunpack.c.h.b16 %v1103
    %v1409 = vunpack.c.l.b16 %v1104
    %v1410 = vunpack.c.h.b16 %v1104
    %v1411 = vunpack.c.l.b16 %v1105
    %v1412 = vunpack.c.h.b16 %v1105
    %v1413 = vunpack.c.l.b16 %v1106
    %v1414 = vunpack.c.h.b16 %v1106
    %v1415 = vunpack.c.l.b16 %v1107
    %v1416 = vunpack.c.h.b16 %v1107
    %v1417 = vunpack.c.l.b16 %v1108
    %v1418 = vunpack.c.h.b16 %v1108
    %v1419 = vunpack.c.l.b16 %v1109
    %v1420 = vunpack.c.h.b16 %v1109
    %v1421 = vunpack.c.l.b16 %v1110
    %v1422 = vunpack.c.h.b16 %v1110
    %v1423 = vunpack.c.l.b16 %v1111
    %v1424 = vunpack.c.h.b16 %v1111
    %v1425 = vunpack.c.l.b16 %v1112
    %v1426 = vunpack.c.h.b16 %v1112
    %v1427 = vunpack.c.l.b16 %v1113
    %v1428 = vunpack.c.h.b16 %v1113
    %v1429 = vunpack.c.l.b16 %v1114
    %v1430 = vunpack.c.h.b16 %v1114
    %v1431 = vunpack.c.l.b16 %v1115
    %v1432 = vunpack.c.h.b16 %v1115
    %v1433 = vunpack.c.l.b16 %v1116
    %v1434 = vunpack.c.h.b16 %v1116
    %v1435 = vunpack.c.l.b16 %v1117
    %v1436 = vunpack.c.h.b16 %v1117
    %v1437 = vunpack.c.l.b16 %v1118
    %v1438 = vunpack.c.h.b16 %v1118
    %v1439 = vunpack.c.l.b16 %v1119
    %v1440 = vunpack.c.h.b16 %v1119
    %v1441 = vunpack.c.l.b16 %v1120
    %v1442 = vunpack.c.h.b16 %v1120
    %v1443 = vunpack.c.l.b16 %v1121
    %v1444 = vunpack.c.h.b16 %v1121
    %v1445 = vunpack.c.l.b16 %v1122
    %v1446 = vunpack.c.h.b16 %v1122
    %v1447 = vunpack.c.l.b16 %v1123
    %v1448 = vunpack.c.h.b16 %v1123
    %v1449 = vunpack.c.l.b16 %v1124
    %v1450 = vunpack.c.h.b16 %v1124
    %v1451 = vunpack.c.l.b16 %v1125
    %v1452 = vunpack.c.h.b16 %v1125
    %v1453 = vunpack.c.l.b16 %v1126
    %v1454 = vunpack.c.h.b16 %v1126
    %v1455 = vunpack.c.l.b16 %v1127
    %v1456 = vunpack.c.h.b16 %v1127
    %v1457 = vunpack.c.l.b16 %v1128
    %v1458 = vunpack.c.h.b16 %v1128
    %v1459 = vunpack.c.l.b16 %v1129
    %v1460 = vunpack.c.h.b16 %v1129
    %v1461 = vunpack.c.l.b16 %v1130
    %v1462 = vunpack.c.h.b16 %v1130
    %v1463 = vunpack.c.l.b16 %v1131
    %v1464 = vunpack.c.h.b16 %v1131
    %v1465 = vunpack.c.l.b16 %v1132
    %v1466 = vunpack.c.h.b16 %v1132
    %v1467 = vunpack.c.l.b16 %v1133
    %v1468 = vunpack.c.h.b16 %v1133
    %v1469 = vunpack.c.l.b16 %v1134
    %v1470 = vunpack.c.h.b16 %v1134
    %v1471 = vunpack.c.l.b16 %v1135
    %v1472 = vunpack.c.h.b16 %v1135
    %v1473 = vunpack.c.l.b16 %v1136
    %v1474 = vunpack.c.h.b16 %v1136
    %v1475 = vunpack.c.l.b16 %v1137
    %v1476 = vunpack.c.h.b16 %v1137
    %v1477 = vunpack.c.l.b16 %v1138
    %v1478 = vunpack.c.h.b16 %v1138
    %v1479 = vunpack.c.l.b16 %v1139
    %v1480 = vunpack.c.h.b16 %v1139
    %v1481 = vunpack.c.l.b16 %v1140
    %v1482 = vunpack.c.h.b16 %v1140
    %v1483 = vunpack.c.l.b16 %v1141
    %v1484 = vunpack.c.h.b16 %v1141
    %v1485 = vunpack.c.l.b16 %v1142
    %v1486 = vunpack.c.h.b16 %v1142
    %v1487 = vunpack.c.l.b16 %v1143
    %v1488 = vunpack.c.h.b16 %v1143
    %v1489 = vunpack.c.l.b16 %v1144
    %v1490 = vunpack.c.h.b16 %v1144
    %v1491 = vunpack.c.l.b16 %v1145
    %v1492 = vunpack.c.h.b16 %v1145
    %v1493 = vunpack.c.l.b16 %v1146
    %v1494 = vunpack.c.h.b16 %v1146
    %v1495 = vunpack.c.l.b16 %v1147
    %v1496 = vunpack.c.h.b16 %v1147
    %v1497 = vunpack.c.l.b16 %v1148
    %v1498 = vunpack.c.h.b16 %v1148
    %v1499 = vunpack.c.l.b16 %v1149
    %v1500 = vunpack.c.h.b16 %v1149
    %v1501 = vunpack.c.l.b16 %v1150
    %v1502 = vunpack.c.h.b16 %v1150
    %v1503 = vunpack.c.l.b16 %v1151
    %v1504 = vunpack.c.h.b16 %v1151
    %v1505 = vunpack.c.l.b16 %v1152
    %v1506 = vunpack.c.h.b16 %v1152
    %v1507 = vunpack.c.l.b16 %v1153
    %v1508 = vunpack.c.h.b16 %v1153
    %v1509 = vunpack.c.l.b16 %v1154
    %v1510 = vunpack.c.h.b16 %v1154
    %v1511 = vunpack.c.l.b16 %v1155
    %v1512 = vunpack.c.h.b16 %v1155
    %v1513 = vunpack.c.l.b16 %v1156
    %v1514 = vunpack.c.h.b16 %v1156
    %v1515 = vunpack.c.l.b16 %v1157
    %v1516 = vunpack.c.h.b16 %v1157
    %v1517 = vunpack.c.l.b16 %v1158
    %v1518 = vunpack.c.h.b16 %v1158
    %v1519 = vunpack.c.l.b16 %v1159
    %v1520 = vunpack.c.h.b16 %v1159
    %v1521 = vunpack.c.l.b16 %v1160
    %v1522 = vunpack.c.h.b16 %v1160
    %v1523 = vunpack.c.l.b16 %v1161
    %v1524 = vunpack.c.h.b16 %v1161
    %v1525 = vunpack.c.l.b16 %v1162
    %v1526 = vunpack.c.h.b16 %v1162
    %v1527 = vunpack.c.l.b16 %v1163
    %v1528 = vunpack.c.h.b16 %v1163
    %v1529 = vunpack.c.l.b16 %v1164
    %v1530 = vunpack.c.h.b16 %v1164
    %v1531 = vunpack.c.l.b16 %v1165
    %v1532 = vunpack.c.h.b16 %v1165
    %v1533 = vunpack.c.l.b16 %v1166
    %v1534 = vunpack.c.h.b16 %v1166
    %v1535 = vunpack.c.l.b16 %v1167
    %v1536 = vunpack.c.h.b16 %v1167
    %v1537 = vunpack.c.l.b16 %v1168
    %v1538 = vunpack.c.h.b16 %v1168
    %v1539 = vunpack.c.l.b16 %v1169
    %v1540 = vunpack.c.h.b16 %v1169
    %v1541 = vunpack.c.l.b16 %v1170
    %v1542 = vunpack.c.h.b16 %v1170
    %v1543 = vunpack.c.l.b16 %v1171
    %v1544 = vunpack.c.h.b16 %v1171
    %v1545 = vunpack.c.l.b16 %v1172
    %v1546 = vunpack.c.h.b16 %v1172
    %v1547 = vunpack.c.l.b16 %v1173
    %v1548 = vunpack.c.h.b16 %v1173
    %v1549 = vunpack.c.l.b16 %v1174
    %v1550 = vunpack.c.h.b16 %v1174
    %v1551 = vunpack.c.l.b16 %v1175
    %v1552 = vunpack.c.h.b16 %v1175
    %v1553 = vunpack.c.l.b16 %v1176
    %v1554 = vunpack.c.h.b16 %v1176
    %v1555 = vunpack.c.l.b16 %v1177
    %v1556 = vunpack.c.h.b16 %v1177
    %v1557 = vunpack.c.l.b16 %v1178
    %v1558 = vunpack.c.h.b16 %v1178
    %v1559 = vunpack.c.l.b16 %v1179
    %v1560 = vunpack.c.h.b16 %v1179
    %v1561 = vunpack.c.l.b16 %v1180
    %v1562 = vunpack.c.h.b16 %v1180
    %v1563 = vunpack.c.l.b16 %v1181
    %v1564 = vunpack.c.h.b16 %v1181
    %v1565 = vunpack.c.l.b16 %v1182
    %v1566 = vunpack.c.h.b16 %v1182
    %v1567 = vunpack.c.l.b16 %v1183
    %v1568 = vunpack.c.h.b16 %v1183
    %v1569 = vunpack.c.l.b16 %v1184
    %v1570 = vunpack.c.h.b16 %v1184
    %v1571 = vunpack.c.l.b16 %v1185
    %v1572 = vunpack.c.h.b16 %v1185
    %v1573 = vunpack.c.l.b16 %v1186
    %v1574 = vunpack.c.h.b16 %v1186
    %v1575 = vunpack.c.l.b16 %v1187
    %v1576 = vunpack.c.h.b16 %v1187
    %v1577 = vunpack.c.l.b16 %v1188
    %v1578 = vunpack.c.h.b16 %v1188
    %v1579 = vunpack.c.l.b16 %v1189
    %v1580 = vunpack.c.h.b16 %v1189
    %v1581 = vunpack.c.l.b16 %v1190
    %v1582 = vunpack.c.h.b16 %v1190
    %v1583 = vunpack.c.l.b16 %v1191
    %v1584 = vunpack.c.h.b16 %v1191
    %v1585 = vunpack.c.l.b16 %v1192
    %v1586 = vunpack.c.h.b16 %v1192
    %v1587 = vunpack.c.l.b16 %v1193
    %v1588 = vunpack.c.h.b16 %v1193
    %v1589 = vunpack.c.l.b16 %v1194
    %v1590 = vunpack.c.h.b16 %v1194
    %v1591 = vunpack.c.l.b16 %v1195
    %v1592 = vunpack.c.h.b16 %v1195
    %v1593 = vunpack.c.l.b16 %v1196
    %v1594 = vunpack.c.h.b16 %v1196
    %v1595 = vunpack.c.l.b16 %v1197
    %v1596 = vunpack.c.h.b16 %v1197
    %v1597 = vunpack.c.l.b16 %v1198
    %v1598 = vunpack.c.h.b16 %v1198
    %v1599 = vunpack.c.l.b16 %v1199
    %v1600 = vunpack.c.h.b16 %v1199
    %v1601 = vunpack.c.l.b16 %v1200
    %v1602 = vunpack.c.h.b16 %v1200
    %v1603 = vunpack.c.l.b16 %v1201
    %v1604 = vunpack.c.h.b16 %v1201
    %v1605 = vunpack.c.l.b16 %v1202
    %v1606 = vunpack.c.h.b16 %v1202
    %v1607 = vunpack.c.l.b16 %v1203
    %v1608 = vunpack.c.h.b16 %v1203
    %v1609 = vunpack.c.l.b16 %v1204
    %v1610 = vunpack.c.h.b16 %v1204
    %v1611 = vpack.c.b16 %v1359, %v1355
    %v1612 = vpack.c.b16 %v1360, %v1356
    %v1613 = vpack.c.b16 %v1361, %v1357
    %v1614 = vpack.c.b16 %v1362, %v1358
    %v1615 = vpack.c.b16 %v1367, %v1363
    %v1616 = vpack.c.b16 %v1368, %v1364
    %v1617 = vpack.c.b16 %v1369, %v1365
    %v1618 = vpack.c.b16 %v1370, %v1366
    %v1619 = vpack.c.b16 %v1375, %v1371
    %v1620 = vpack.c.b16 %v1376, %v1372
    %v1621 = vpack.c.b16 %v1377, %v1373
    %v1622 = vpack.c.b16 %v1378, %v1374
    %v1623 = vpack.c.b16 %v1383, %v1379
    %v1624 = vpack.c.b16 %v1384, %v1380
    %v1625 = vpack.c.b16 %v1385, %v1381
    %v1626 = vpack.c.b16 %v1386, %v1382
    %v1627 = vpack.c.b16 %v1391, %v1387
    %v1628 = vpack.c.b16 %v1392, %v1388
    %v1629 = vpack.c.b16 %v1393, %v1389
    %v1630 = vpack.c.b16 %v1394, %v1390
    %v1631 = vpack.c.b16 %v1399, %v1395
    %v1632 = vpack.c.b16 %v1400, %v1396
    %v1633 = vpack.c.b16 %v1401, %v1397
    %v1634 = vpack.c.b16 %v1402, %v1398
    %v1635 = vpack.c.b16 %v1407, %v1403
    %v1636 = vpack.c.b16 %v1408, %v1404
    %v1637 = vpack.c.b16 %v1409, %v1405
    %v1638 = vpack.c.b16 %v1410, %v1406
    %v1639 = vpack.c.b16 %v1415, %v1411
    %v1640 = vpack.c.b16 %v1416, %v1412
    %v1641 = vpack.c.b16 %v1417, %v1413
    %v1642 = vpack.c.b16 %v1418, %v1414
    %v1643 = vpack.c.b16 %v1423, %v1419
    %v1644 = vpack.c.b16 %v1424, %v1420
    %v1645 = vpack.c.b16 %v1425, %v1421
    %v1646 = vpack.c.b16 %v1426, %v1422
    %v1647 = vpack.c.b16 %v1431, %v1427
    %v1648 = vpack.c.b16 %v1432, %v1428
    %v1649 = vpack.c.b16 %v1433, %v1429
    %v1650 = vpack.c.b16 %v1434, %v1430
    %v1651 = vpack.c.b16 %v1439, %v1435
    %v1652 = vpack.c.b16 %v1440, %v1436
    %v1653 = vpack.c.b16 %v1441, %v1437
    %v1654 = vpack.c.b16 %v1442, %v1438
    %v1655 = vpack.c.b16 %v1447, %v1443
    %v1656 = vpack.c.b16 %v1448, %v1444
    %v1657 = vpack.c.b16 %v1449, %v1445
    %v1658 = vpack.c.b16 %v1450, %v1446
    %v1659 = vpack.c.b16 %v1455, %v1451
    %v1660 = vpack.c.b16 %v1456, %v1452
    %v1661 = vpack.c.b16 %v1457, %v1453
    %v1662 = vpack.c.b16 %v1458, %v1454
    %v1663 = vpack.c.b16 %v1463, %v1459
    %v1664 = vpack.c.b16 %v1464, %v1460
    %v1665 = vpack.c.b16 %v1465, %v1461
    %v1666 = vpack.c.b16 %v1466, %v1462
    %v1667 = vpack.c.b16 %v1471, %v1467
    %v1668 = vpack.c.b16 %v1472, %v1468
    %v1669 = vpack.c.b16 %v1473, %v1469
    %v1670 = vpack.c.b16 %v1474, %v1470
    %v1671 = vpack.c.b16 %v1479, %v1475
    %v1672 = vpack.c.b16 %v1480, %v1476
    %v1673 = vpack.c.b16 %v1481, %v1477
    %v1674 = vpack.c.b16 %v1482, %v1478
    %v1675 = vpack.c.b16 %v1487, %v1483
    %v1676 = vpack.c.b16 %v1488, %v1484
    %v1677 = vpack.c.b16 %v1489, %v1485
    %v1678 = vpack.c.b16 %v1490, %v1486
    %v1679 = vpack.c.b16 %v1495, %v1491
    %v1680 = vpack.c.b16 %v1496, %v1492
    %v1681 = vpack.c.b16 %v1497, %v1493
    %v1682 = vpack.c.b16 %v1498, %v1494
    %v1683 = vpack.c.b16 %v1503, %v1499
    %v1684 = vpack.c.b16 %v1504, %v1500
    %v1685 = vpack.c.b16 %v1505, %v1501
    %v1686 = vpack.c.b16 %v1506, %v1502
    %v1687 = vpack.c.b16 %v1511, %v1507
    %v1688 = vpack.c.b16 %v1512, %v1508
    %v1689 = vpack.c.b16 %v1513, %v1509
    %v1690 = vpack.c.b16 %v1514, %v1510
    %v1691 = vpack.c.b16 %v1519, %v1515
    %v1692 = vpack.c.b16 %v1520, %v1516
    %v1693 = vpack.c.b16 %v1521, %v1517
    %v1694 = vpack.c.b16 %v1522, %v1518
    %v1695 = vpack.c.b16 %v1527, %v1523
    %v1696 = vpack.c.b16 %v1528, %v1524
    %v1697 = vpack.c.b16 %v1529, %v1525
    %v1698 = vpack.c.b16 %v1530, %v1526
    %v1699 = vpack.c.b16 %v1535, %v1531
    %v1700 = vpack.c.b16 %v1536, %v1532
    %v1701 = vpack.c.b16 %v1537, %v1533
    %v1702 = vpack.c.b16 %v1538, %v1534
    %v1703 = vpack.c.b16 %v1543, %v1539
    %v1704 = vpack.c.b16 %v1544, %v1540
    %v1705 = vpack.c.b16 %v1545, %v1541
    %v1706 = vpack.c.b16 %v1546, %v1542
    %v1707 = vpack.c.b16 %v1551, %v1547
    %v1708 = vpack.c.b16 %v1552, %v1548
    %v1709 = vpack.c.b16 %v1553, %v1549
    %v1710 = vpack.c.b16 %v1554, %v1550
    %v1711 = vpack.c.b16 %v1559, %v1555
    %v1712 = vpack.c.b16 %v1560, %v1556
    %v1713 = vpack.c.b16 %v1561, %v1557
    %v1714 = vpack.c.b16 %v1562, %v1558
    %v1715 = vpack.c.b16 %v1567, %v1563
    %v1716 = vpack.c.b16 %v1568, %v1564
    %v1717 = vpack.c.b16 %v1569, %v1565
    %v1718 = vpack.c.b16 %v1570, %v1566
    %v1719 = vpack.c.b16 %v1575, %v1571
    %v1720 = vpack.c.b16 %v1576, %v1572
    %v1721 = vpack.c.b16 %v1577, %v1573
    %v1722 = vpack.c.b16 %v1578, %v1574
    %v1723 = vpack.c.b16 %v1583, %v1579
    %v1724 = vpack.c.b16 %v1584, %v1580
    %v1725 = vpack.c.b16 %v1585, %v1581
    %v1726 = vpack.c.b16 %v1586, %v1582
    %v1727 = vpack.c.b16 %v1591, %v1587
    %v1728 = vpack.c.b16 %v1592, %v1588
    %v1729 = vpack.c.b16 %v1593, %v1589
    %v1730 = vpack.c.b16 %v1594, %v1590
    %v1731 = vpack.c.b16 %v1599, %v1595
    %v1732 = vpack.c.b16 %v1600, %v1596
    %v1733 = vpack.c.b16 %v1601, %v1597
    %v1734 = vpack.c.b16 %v1602, %v1598
    %v1735 = vpack.c.b16 %v1607, %v1603
    %v1736 = vpack.c.b16 %v1608, %v1604
    %v1737 = vpack.c.b16 %v1609, %v1605
    %v1738 = vpack.c.b16 %v1610, %v1606
    %1867 = vmatprep.subr.bf16.mxu0 %v1612
    %1868 = vmatpush1.bf16.msra.mxu0 %v1611
    %1869 = vmatprep.subr.bf16.mxu0 %v1616
    %1870 = vmatpush1.bf16.msra.mxu0 %v1615
    %1871 = vmatprep.subr.bf16.mxu0 %v1620
    %1872 = vmatpush1.bf16.msra.mxu0 %v1619
    %1873 = vmatprep.subr.bf16.mxu0 %v1624
    %1874 = vmatpush1.bf16.msra.mxu0 %v1623
    %1875 = vmatprep.subr.bf16.mxu0 %v1628
    %1876 = vmatpush1.bf16.msra.mxu0 %v1627
    %1877 = vmatprep.subr.bf16.mxu0 %v1632
    %1878 = vmatpush1.bf16.msra.mxu0 %v1631
    %1879 = vmatprep.subr.bf16.mxu0 %v1636
    %1880 = vmatpush1.bf16.msra.mxu0 %v1635
    %1881 = vmatprep.subr.bf16.mxu0 %v1640
    %1882 = vmatpush1.bf16.msra.mxu0 %v1639
    %1883 = vmatprep.subr.bf16.mxu0 %v1644
    %1884 = vmatpush1.bf16.msra.mxu0 %v1643
    %1885 = vmatprep.subr.bf16.mxu0 %v1648
    %1886 = vmatpush1.bf16.msra.mxu0 %v1647
    %1887 = vmatprep.subr.bf16.mxu0 %v1652
    %1888 = vmatpush1.bf16.msra.mxu0 %v1651
    %1889 = vmatprep.subr.bf16.mxu0 %v1656
    %1890 = vmatpush1.bf16.msra.mxu0 %v1655
    %1891 = vmatprep.subr.bf16.mxu0 %v1660
    %1892 = vmatpush1.bf16.msra.mxu0 %v1659
    %1893 = vmatprep.subr.bf16.mxu0 %v1664
    %1894 = vmatpush1.bf16.msra.mxu0 %v1663
    %1895 = vmatprep.subr.bf16.mxu0 %v1668
    %1896 = vmatpush1.bf16.msra.mxu0 %v1667
    %1897 = vmatprep.subr.bf16.mxu0 %v1672
    %1898 = vmatpush1.bf16.msra.mxu0 %v1671
    %1899 = vmatprep.mubr.bf16.mxu0 %v1074
    %1900 = vmatmul.mubr.bf16.gmra.mrb[0].mxu0 %v1073
    %v1901 = vpop.f32.mrb[0].mxu0
    %v1902 = vadd.f32 %v1210, %v1901
    %v1903 = vpop.f32.mrb[0].mxu0
    %v1904 = vadd.f32 %v1214, %v1903
    %v1905 = vpop.f32.mrb[0].mxu0
    %v1906 = vadd.f32 %v1210, %v1905
    %v1907 = vpop.f32.mrb[0].mxu0
    %v1908 = vadd.f32 %v1214, %v1907
    %1909 = vdwg.mxu0
    %1910 = vmatprep.subr.bf16.mxu0 %v1676
    %1911 = vmatpush1.bf16.msra.mxu0 %v1675
    %1912 = vmatprep.subr.bf16.mxu0 %v1680
    %1913 = vmatpush1.bf16.msra.mxu0 %v1679
    %1914 = vmatprep.subr.bf16.mxu0 %v1684
    %1915 = vmatpush1.bf16.msra.mxu0 %v1683
    %1916 = vmatprep.subr.bf16.mxu0 %v1688
    %1917 = vmatpush1.bf16.msra.mxu0 %v1687
    %1918 = vmatprep.subr.bf16.mxu0 %v1692
    %1919 = vmatpush1.bf16.msra.mxu0 %v1691
    %1920 = vmatprep.subr.bf16.mxu0 %v1696
    %1921 = vmatpush1.bf16.msra.mxu0 %v1695
    %1922 = vmatprep.subr.bf16.mxu0 %v1700
    %1923 = vmatpush1.bf16.msra.mxu0 %v1699
    %1924 = vmatprep.subr.bf16.mxu0 %v1704
    %1925 = vmatpush1.bf16.msra.mxu0 %v1703
    %1926 = vmatprep.subr.bf16.mxu0 %v1708
    %1927 = vmatpush1.bf16.msra.mxu0 %v1707
    %1928 = vmatprep.subr.bf16.mxu0 %v1712
    %1929 = vmatpush1.bf16.msra.mxu0 %v1711
    %1930 = vmatprep.subr.bf16.mxu0 %v1716
    %1931 = vmatpush1.bf16.msra.mxu0 %v1715
    %1932 = vmatprep.subr.bf16.mxu0 %v1720
    %1933 = vmatpush1.bf16.msra.mxu0 %v1719
    %1934 = vmatprep.subr.bf16.mxu0 %v1724
    %1935 = vmatpush1.bf16.msra.mxu0 %v1723
    %1936 = vmatprep.subr.bf16.mxu0 %v1728
    %1937 = vmatpush1.bf16.msra.mxu0 %v1727
    %1938 = vmatprep.subr.bf16.mxu0 %v1732
    %1939 = vmatpush1.bf16.msra.mxu0 %v1731
    %1940 = vmatprep.subr.bf16.mxu0 %v1736
    %1941 = vmatpush1.bf16.msra.mxu0 %v1735
    %1942 = vmatprep.mubr.bf16.mxu0 %v1076
    %1943 = vmatmul.mubr.bf16.gmra.mrb[0].mxu0 %v1075
    %v1944 = vpop.f32.mrb[0].mxu0
    %v1945 = vadd.f32 %v1902, %v1944
    %v1946 = vpop.f32.mrb[0].mxu0
    %v1947 = vadd.f32 %v1904, %v1946
    %v1948 = vpop.f32.mrb[0].mxu0
    %v1949 = vadd.f32 %v1906, %v1948
    %v1950 = vpop.f32.mrb[0].mxu0
    %v1951 = vadd.f32 %v1908, %v1950
    %1952 = vdwg.mxu0
    %1953 = vmatprep.subr.bf16.mxu0 %v1614
    %1954 = vmatpush1.bf16.msra.mxu0 %v1613
    %1955 = vmatprep.subr.bf16.mxu0 %v1618
    %1956 = vmatpush1.bf16.msra.mxu0 %v1617
    %1957 = vmatprep.subr.bf16.mxu0 %v1622
    %1958 = vmatpush1.bf16.msra.mxu0 %v1621
    %1959 = vmatprep.subr.bf16.mxu0 %v1626
    %1960 = vmatpush1.bf16.msra.mxu0 %v1625
    %1961 = vmatprep.subr.bf16.mxu0 %v1630
    %1962 = vmatpush1.bf16.msra.mxu0 %v1629
    %1963 = vmatprep.subr.bf16.mxu0 %v1634
    %1964 = vmatpush1.bf16.msra.mxu0 %v1633
    %1965 = vmatprep.subr.bf16.mxu0 %v1638
    %1966 = vmatpush1.bf16.msra.mxu0 %v1637
    %1967 = vmatprep.subr.bf16.mxu0 %v1642
    %1968 = vmatpush1.bf16.msra.mxu0 %v1641
    %1969 = vmatprep.subr.bf16.mxu0 %v1646
    %1970 = vmatpush1.bf16.msra.mxu0 %v1645
    %1971 = vmatprep.subr.bf16.mxu0 %v1650
    %1972 = vmatpush1.bf16.msra.mxu0 %v1649
    %1973 = vmatprep.subr.bf16.mxu0 %v1654
    %1974 = vmatpush1.bf16.msra.mxu0 %v1653
    %1975 = vmatprep.subr.bf16.mxu0 %v1658
    %1976 = vmatpush1.bf16.msra.mxu0 %v1657
    %1977 = vmatprep.subr.bf16.mxu0 %v1662
    %1978 = vmatpush1.bf16.msra.mxu0 %v1661
    %1979 = vmatprep.subr.bf16.mxu0 %v1666
    %1980 = vmatpush1.bf16.msra.mxu0 %v1665
    %1981 = vmatprep.subr.bf16.mxu0 %v1670
    %1982 = vmatpush1.bf16.msra.mxu0 %v1669
    %1983 = vmatprep.subr.bf16.mxu0 %v1674
    %1984 = vmatpush1.bf16.msra.mxu0 %v1673
    %1985 = vmatprep.mubr.bf16.mxu0 %v1074
    %1986 = vmatmul.mubr.bf16.gmra.mrb[0].mxu0 %v1073
    %v1987 = vpop.f32.mrb[0].mxu0
    %v1988 = vadd.f32 %v1218, %v1987
    %v1989 = vpop.f32.mrb[0].mxu0
    %v1990 = vadd.f32 %v1222, %v1989
    %v1991 = vpop.f32.mrb[0].mxu0
    %v1992 = vadd.f32 %v1218, %v1991
    %v1993 = vpop.f32.mrb[0].mxu0
    %v1994 = vadd.f32 %v1222, %v1993
    %1995 = vdwg.mxu0
    %1996 = vmatprep.subr.bf16.mxu0 %v1678
    %1997 = vmatpush1.bf16.msra.mxu0 %v1677
    %1998 = vmatprep.subr.bf16.mxu0 %v1682
    %1999 = vmatpush1.bf16.msra.mxu0 %v1681
    %2000 = vmatprep.subr.bf16.mxu0 %v1686
    %2001 = vmatpush1.bf16.msra.mxu0 %v1685
    %2002 = vmatprep.subr.bf16.mxu0 %v1690
    %2003 = vmatpush1.bf16.msra.mxu0 %v1689
    %2004 = vmatprep.subr.bf16.mxu0 %v1694
    %2005 = vmatpush1.bf16.msra.mxu0 %v1693
    %2006 = vmatprep.subr.bf16.mxu0 %v1698
    %2007 = vmatpush1.bf16.msra.mxu0 %v1697
    %2008 = vmatprep.subr.bf16.mxu0 %v1702
    %2009 = vmatpush1.bf16.msra.mxu0 %v1701
    %2010 = vmatprep.subr.bf16.mxu0 %v1706
    %2011 = vmatpush1.bf16.msra.mxu0 %v1705
    %2012 = vmatprep.subr.bf16.mxu0 %v1710
    %2013 = vmatpush1.bf16.msra.mxu0 %v1709
    %2014 = vmatprep.subr.bf16.mxu0 %v1714
    %2015 = vmatpush1.bf16.msra.mxu0 %v1713
    %2016 = vmatprep.subr.bf16.mxu0 %v1718
    %2017 = vmatpush1.bf16.msra.mxu0 %v1717
    %2018 = vmatprep.subr.bf16.mxu0 %v1722
    %2019 = vmatpush1.bf16.msra.mxu0 %v1721
    %2020 = vmatprep.subr.bf16.mxu0 %v1726
    %2021 = vmatpush1.bf16.msra.mxu0 %v1725
    %2022 = vmatprep.subr.bf16.mxu0 %v1730
    %2023 = vmatpush1.bf16.msra.mxu0 %v1729
    %2024 = vmatprep.subr.bf16.mxu0 %v1734
    %2025 = vmatpush1.bf16.msra.mxu0 %v1733
    %2026 = vmatprep.subr.bf16.mxu0 %v1738
    %2027 = vmatpush1.bf16.msra.mxu0 %v1737
    %2028 = vmatprep.mubr.bf16.mxu0 %v1076
    %2029 = vmatmul.mubr.bf16.gmra.mrb[0].mxu0 %v1075
    %v2030 = vpop.f32.mrb[0].mxu0
    %v2031 = vadd.f32 %v1988, %v2030
    %v2032 = vpop.f32.mrb[0].mxu0
    %v2033 = vadd.f32 %v1990, %v2032
    %v2034 = vpop.f32.mrb[0].mxu0
    %v2035 = vadd.f32 %v1992, %v2034
    %v2036 = vpop.f32.mrb[0].mxu0
    %v2037 = vadd.f32 %v1994, %v2036
    %2038 = vdwg.mxu0
    %v2039 = vpack.c.bf16 %v1949, %v1945
    %v2040 = vpack.c.bf16 %v1951, %v1947
    %v2041 = vpack.c.bf16 %v2035, %v2031
    %v2042 = vpack.c.bf16 %v2037, %v2033
    %v2043 = vmax.bf16 %v2039, 0
    %v2044 = vmax.bf16 %v2040, 0
    %v2045 = vmax.bf16 %v2041, 0
    %v2046 = vmax.bf16 %v2042, 0
    %v2047 = vld [vmem:[#allocation10] sm:$0xff]
    %v2048 = vld [vmem:[#allocation10 + $0x8] sm:$0xf]
    %v2049 = vld [vmem:[#allocation10 + $0xc] sm:$0xff]
    %v2050 = vld [vmem:[#allocation10 + $0x14] sm:$0xf]
    %v2051 = vld [vmem:[#allocation10 + $0x18] sm:$0xff]
    %v2052 = vld [vmem:[#allocation10 + $0x20] sm:$0xf]
    %v2053 = vld [vmem:[#allocation10 + $0x24] sm:$0xff]
    %v2054 = vld [vmem:[#allocation10 + $0x2c] sm:$0xf]
    %v2055 = vld [vmem:[#allocation10 + $0x30] sm:$0xff]
    %v2056 = vld [vmem:[#allocation10 + $0x38] sm:$0xf]
    %v2057 = vld [vmem:[#allocation10 + $0x3c] sm:$0xff]
    %v2058 = vld [vmem:[#allocation10 + $0x44] sm:$0xf]
    %v2059 = vld [vmem:[#allocation10 + $0x48] sm:$0xff]
    %v2060 = vld [vmem:[#allocation10 + $0x50] sm:$0xf]
    %v2061 = vld [vmem:[#allocation10 + $0x54] sm:$0xff]
    %v2062 = vld [vmem:[#allocation10 + $0x5c] sm:$0xf]
    %v2063 = vld [vmem:[#allocation10 + $0x60] sm:$0xff]
    %v2064 = vld [vmem:[#allocation10 + $0x68] sm:$0xf]
    %v2065 = vld [vmem:[#allocation10 + $0x6c] sm:$0xff]
    %v2066 = vld [vmem:[#allocation10 + $0x74] sm:$0xf]
    %v2067 = vld [vmem:[#allocation10 + $0x78] sm:$0xff]
    %v2068 = vld [vmem:[#allocation10 + $0x80] sm:$0xf]
    %v2069 = vld [vmem:[#allocation10 + $0x84] sm:$0xff]
    %v2070 = vld [vmem:[#allocation10 + $0x8c] sm:$0xf]
    %v2071 = vld [vmem:[#allocation10 + $0x90] sm:$0xff]
    %v2072 = vld [vmem:[#allocation10 + $0x98] sm:$0xf]
    %v2073 = vld [vmem:[#allocation10 + $0x9c] sm:$0xff]
    %v2074 = vld [vmem:[#allocation10 + $0xa4] sm:$0xf]
    %v2075 = vld [vmem:[#allocation10 + $0xa8] sm:$0xff]
    %v2076 = vld [vmem:[#allocation10 + $0xb0] sm:$0xf]
    %v2077 = vld [vmem:[#allocation10 + $0xb4] sm:$0xff]
    %v2078 = vld [vmem:[#allocation10 + $0xbc] sm:$0xf]
    %v2079 = vld [vmem:[#allocation10 + $0xc0] sm:$0xff]
    %v2080 = vld [vmem:[#allocation10 + $0xc8] sm:$0xf]
    %v2081 = vld [vmem:[#allocation10 + $0xcc] sm:$0xff]
    %v2082 = vld [vmem:[#allocation10 + $0xd4] sm:$0xf]
    %v2083 = vld [vmem:[#allocation10 + $0xd8] sm:$0xff]
    %v2084 = vld [vmem:[#allocation10 + $0xe0] sm:$0xf]
    %v2085 = vld [vmem:[#allocation10 + $0xe4] sm:$0xff]
    %v2086 = vld [vmem:[#allocation10 + $0xec] sm:$0xf]
    %v2087 = vld [vmem:[#allocation10 + $0xf0] sm:$0xff]
    %v2088 = vld [vmem:[#allocation10 + $0xf8] sm:$0xf]
    %v2089 = vld [vmem:[#allocation10 + $0xfc] sm:$0xff]
    %v2090 = vld [vmem:[#allocation10 + $0x104] sm:$0xf]
    %v2091 = vld [vmem:[#allocation10 + $0x108] sm:$0xff]
    %v2092 = vld [vmem:[#allocation10 + $0x110] sm:$0xf]
    %v2093 = vld [vmem:[#allocation10 + $0x114] sm:$0xff]
    %v2094 = vld [vmem:[#allocation10 + $0x11c] sm:$0xf]
    %v2095 = vld [vmem:[#allocation10 + $0x120] sm:$0xff]
    %v2096 = vld [vmem:[#allocation10 + $0x128] sm:$0xf]
    %v2097 = vld [vmem:[#allocation10 + $0x12c] sm:$0xff]
    %v2098 = vld [vmem:[#allocation10 + $0x134] sm:$0xf]
    %v2099 = vld [vmem:[#allocation10 + $0x138] sm:$0xff]
    %v2100 = vld [vmem:[#allocation10 + $0x140] sm:$0xf]
    %v2101 = vld [vmem:[#allocation10 + $0x144] sm:$0xff]
    %v2102 = vld [vmem:[#allocation10 + $0x14c] sm:$0xf]
    %v2103 = vld [vmem:[#allocation10 + $0x150] sm:$0xff]
    %v2104 = vld [vmem:[#allocation10 + $0x158] sm:$0xf]
    %v2105 = vld [vmem:[#allocation10 + $0x15c] sm:$0xff]
    %v2106 = vld [vmem:[#allocation10 + $0x164] sm:$0xf]
    %v2107 = vld [vmem:[#allocation10 + $0x168] sm:$0xff]
    %v2108 = vld [vmem:[#allocation10 + $0x170] sm:$0xf]
    %v2109 = vld [vmem:[#allocation10 + $0x174] sm:$0xff]
    %v2110 = vld [vmem:[#allocation10 + $0x17c] sm:$0xf]
    %v2111 = vld [vmem:[#allocation10 + $0x180] sm:$0xff]
    %v2112 = vld [vmem:[#allocation10 + $0x188] sm:$0xf]
    %v2113 = vld [vmem:[#allocation10 + $0x18c] sm:$0xff]
    %v2114 = vld [vmem:[#allocation10 + $0x194] sm:$0xf]
    %v2115 = vld [vmem:[#allocation10 + $0x198] sm:$0xff]
    %v2116 = vld [vmem:[#allocation10 + $0x1a0] sm:$0xf]
    %v2117 = vld [vmem:[#allocation10 + $0x1a4] sm:$0xff]
    %v2118 = vld [vmem:[#allocation10 + $0x1ac] sm:$0xf]
    %v2119 = vld [vmem:[#allocation10 + $0x1b0] sm:$0xff]
    %v2120 = vld [vmem:[#allocation10 + $0x1b8] sm:$0xf]
    %v2121 = vld [vmem:[#allocation10 + $0x1bc] sm:$0xff]
    %v2122 = vld [vmem:[#allocation10 + $0x1c4] sm:$0xf]
    %v2123 = vld [vmem:[#allocation10 + $0x1c8] sm:$0xff]
    %v2124 = vld [vmem:[#allocation10 + $0x1d0] sm:$0xf]
    %v2125 = vld [vmem:[#allocation10 + $0x1d4] sm:$0xff]
    %v2126 = vld [vmem:[#allocation10 + $0x1dc] sm:$0xf]
    %v2127 = vld [vmem:[#allocation10 + $0x1e0] sm:$0xff]
    %v2128 = vld [vmem:[#allocation10 + $0x1e8] sm:$0xf]
    %v2129 = vld [vmem:[#allocation10 + $0x1ec] sm:$0xff]
    %v2130 = vld [vmem:[#allocation10 + $0x1f4] sm:$0xf]
    %v2131 = vld [vmem:[#allocation10 + $0x1f8] sm:$0xff]
    %v2132 = vld [vmem:[#allocation10 + $0x200] sm:$0xf]
    %v2133 = vld [vmem:[#allocation10 + $0x204] sm:$0xff]
    %v2134 = vld [vmem:[#allocation10 + $0x20c] sm:$0xf]
    %v2135 = vld [vmem:[#allocation10 + $0x210] sm:$0xff]
    %v2136 = vld [vmem:[#allocation10 + $0x218] sm:$0xf]
    %v2137 = vld [vmem:[#allocation10 + $0x21c] sm:$0xff]
    %v2138 = vld [vmem:[#allocation10 + $0x224] sm:$0xf]
    %v2139 = vld [vmem:[#allocation10 + $0x228] sm:$0xff]
    %v2140 = vld [vmem:[#allocation10 + $0x230] sm:$0xf]
    %v2141 = vld [vmem:[#allocation10 + $0x234] sm:$0xff]
    %v2142 = vld [vmem:[#allocation10 + $0x23c] sm:$0xf]
    %v2143 = vld [vmem:[#allocation10 + $0x240] sm:$0xff]
    %v2144 = vld [vmem:[#allocation10 + $0x248] sm:$0xf]
    %v2145 = vld [vmem:[#allocation10 + $0x24c] sm:$0xff]
    %v2146 = vld [vmem:[#allocation10 + $0x254] sm:$0xf]
    %v2147 = vld [vmem:[#allocation10 + $0x258] sm:$0xff]
    %v2148 = vld [vmem:[#allocation10 + $0x260] sm:$0xf]
    %v2149 = vld [vmem:[#allocation10 + $0x264] sm:$0xff]
    %v2150 = vld [vmem:[#allocation10 + $0x26c] sm:$0xf]
    %v2151 = vld [vmem:[#allocation10 + $0x270] sm:$0xff]
    %v2152 = vld [vmem:[#allocation10 + $0x278] sm:$0xf]
    %v2153 = vld [vmem:[#allocation10 + $0x27c] sm:$0xff]
    %v2154 = vld [vmem:[#allocation10 + $0x284] sm:$0xf]
    %v2155 = vld [vmem:[#allocation10 + $0x288] sm:$0xff]
    %v2156 = vld [vmem:[#allocation10 + $0x290] sm:$0xf]
    %v2157 = vld [vmem:[#allocation10 + $0x294] sm:$0xff]
    %v2158 = vld [vmem:[#allocation10 + $0x29c] sm:$0xf]
    %v2159 = vld [vmem:[#allocation10 + $0x2a0] sm:$0xff]
    %v2160 = vld [vmem:[#allocation10 + $0x2a8] sm:$0xf]
    %v2161 = vld [vmem:[#allocation10 + $0x2ac] sm:$0xff]
    %v2162 = vld [vmem:[#allocation10 + $0x2b4] sm:$0xf]
    %v2163 = vld [vmem:[#allocation10 + $0x2b8] sm:$0xff]
    %v2164 = vld [vmem:[#allocation10 + $0x2c0] sm:$0xf]
    %v2165 = vld [vmem:[#allocation10 + $0x2c4] sm:$0xff]
    %v2166 = vld [vmem:[#allocation10 + $0x2cc] sm:$0xf]
    %v2167 = vld [vmem:[#allocation10 + $0x2d0] sm:$0xff]
    %v2168 = vld [vmem:[#allocation10 + $0x2d8] sm:$0xf]
    %v2169 = vld [vmem:[#allocation10 + $0x2dc] sm:$0xff]
    %v2170 = vld [vmem:[#allocation10 + $0x2e4] sm:$0xf]
    %v2171 = vld [vmem:[#allocation10 + $0x2e8] sm:$0xff]
    %v2172 = vld [vmem:[#allocation10 + $0x2f0] sm:$0xf]
    %v2173 = vld [vmem:[#allocation10 + $0x2f4] sm:$0xff]
    %v2174 = vld [vmem:[#allocation10 + $0x2fc] sm:$0xf]
    %v2175 = vld [vmem:[%s8] sm:$0x7]
    %v2177 = vlaneseq
    %v2178 = vshrl.u32 %v2177, 7
    %v2179 = vsub.s32 0, %v2178
    %v2180 = vrot.slane %v2175, %v2179
    %v2181 = vlaneseq
    %v2182 = vshrl.u32 %v2181, 7
    %v2183 = vsub.s32 1, %v2182
    %v2184 = vrot.slane %v2175, %v2183
    %v2185 = vlaneseq
    %v2186 = vshrl.u32 %v2185, 7
    %v2187 = vsub.s32 2, %v2186
    %v2188 = vrot.slane %v2175, %v2187
    %v2320 = vunpack.c.l.b16 %v2047
    %v2321 = vunpack.c.h.b16 %v2047
    %v2322 = vunpack.c.l.b16 %v2048
    %v2323 = vunpack.c.l.b16 %v2049
    %v2324 = vunpack.c.h.b16 %v2049
    %v2325 = vunpack.c.l.b16 %v2050
    %v2326 = vunpack.c.l.b16 %v2051
    %v2327 = vunpack.c.h.b16 %v2051
    %v2328 = vunpack.c.l.b16 %v2052
    %v2329 = vunpack.c.l.b16 %v2053
    %v2330 = vunpack.c.h.b16 %v2053
    %v2331 = vunpack.c.l.b16 %v2054
    %v2332 = vunpack.c.l.b16 %v2055
    %v2333 = vunpack.c.h.b16 %v2055
    %v2334 = vunpack.c.l.b16 %v2056
    %v2335 = vunpack.c.l.b16 %v2057
    %v2336 = vunpack.c.h.b16 %v2057
    %v2337 = vunpack.c.l.b16 %v2058
    %v2338 = vunpack.c.l.b16 %v2059
    %v2339 = vunpack.c.h.b16 %v2059
    %v2340 = vunpack.c.l.b16 %v2060
    %v2341 = vunpack.c.l.b16 %v2061
    %v2342 = vunpack.c.h.b16 %v2061
    %v2343 = vunpack.c.l.b16 %v2062
    %v2344 = vunpack.c.l.b16 %v2063
    %v2345 = vunpack.c.h.b16 %v2063
    %v2346 = vunpack.c.l.b16 %v2064
    %v2347 = vunpack.c.l.b16 %v2065
    %v2348 = vunpack.c.h.b16 %v2065
    %v2349 = vunpack.c.l.b16 %v2066
    %v2350 = vunpack.c.l.b16 %v2067
    %v2351 = vunpack.c.h.b16 %v2067
    %v2352 = vunpack.c.l.b16 %v2068
    %v2353 = vunpack.c.l.b16 %v2069
    %v2354 = vunpack.c.h.b16 %v2069
    %v2355 = vunpack.c.l.b16 %v2070
    %v2356 = vunpack.c.l.b16 %v2071
    %v2357 = vunpack.c.h.b16 %v2071
    %v2358 = vunpack.c.l.b16 %v2072
    %v2359 = vunpack.c.l.b16 %v2073
    %v2360 = vunpack.c.h.b16 %v2073
    %v2361 = vunpack.c.l.b16 %v2074
    %v2362 = vunpack.c.l.b16 %v2075
    %v2363 = vunpack.c.h.b16 %v2075
    %v2364 = vunpack.c.l.b16 %v2076
    %v2365 = vunpack.c.l.b16 %v2077
    %v2366 = vunpack.c.h.b16 %v2077
    %v2367 = vunpack.c.l.b16 %v2078
    %v2368 = vunpack.c.l.b16 %v2079
    %v2369 = vunpack.c.h.b16 %v2079
    %v2370 = vunpack.c.l.b16 %v2080
    %v2371 = vunpack.c.l.b16 %v2081
    %v2372 = vunpack.c.h.b16 %v2081
    %v2373 = vunpack.c.l.b16 %v2082
    %v2374 = vunpack.c.l.b16 %v2083
    %v2375 = vunpack.c.h.b16 %v2083
    %v2376 = vunpack.c.l.b16 %v2084
    %v2377 = vunpack.c.l.b16 %v2085
    %v2378 = vunpack.c.h.b16 %v2085
    %v2379 = vunpack.c.l.b16 %v2086
    %v2380 = vunpack.c.l.b16 %v2087
    %v2381 = vunpack.c.h.b16 %v2087
    %v2382 = vunpack.c.l.b16 %v2088
    %v2383 = vunpack.c.l.b16 %v2089
    %v2384 = vunpack.c.h.b16 %v2089
    %v2385 = vunpack.c.l.b16 %v2090
    %v2386 = vunpack.c.l.b16 %v2091
    %v2387 = vunpack.c.h.b16 %v2091
    %v2388 = vunpack.c.l.b16 %v2092
    %v2389 = vunpack.c.l.b16 %v2093
    %v2390 = vunpack.c.h.b16 %v2093
    %v2391 = vunpack.c.l.b16 %v2094
    %v2392 = vunpack.c.l.b16 %v2095
    %v2393 = vunpack.c.h.b16 %v2095
    %v2394 = vunpack.c.l.b16 %v2096
    %v2395 = vunpack.c.l.b16 %v2097
    %v2396 = vunpack.c.h.b16 %v2097
    %v2397 = vunpack.c.l.b16 %v2098
    %v2398 = vunpack.c.l.b16 %v2099
    %v2399 = vunpack.c.h.b16 %v2099
    %v2400 = vunpack.c.l.b16 %v2100
    %v2401 = vunpack.c.l.b16 %v2101
    %v2402 = vunpack.c.h.b16 %v2101
    %v2403 = vunpack.c.l.b16 %v2102
    %v2404 = vunpack.c.l.b16 %v2103
    %v2405 = vunpack.c.h.b16 %v2103
    %v2406 = vunpack.c.l.b16 %v2104
    %v2407 = vunpack.c.l.b16 %v2105
    %v2408 = vunpack.c.h.b16 %v2105
    %v2409 = vunpack.c.l.b16 %v2106
    %v2410 = vunpack.c.l.b16 %v2107
    %v2411 = vunpack.c.h.b16 %v2107
    %v2412 = vunpack.c.l.b16 %v2108
    %v2413 = vunpack.c.l.b16 %v2109
    %v2414 = vunpack.c.h.b16 %v2109
    %v2415 = vunpack.c.l.b16 %v2110
    %v2416 = vunpack.c.l.b16 %v2111
    %v2417 = vunpack.c.h.b16 %v2111
    %v2418 = vunpack.c.l.b16 %v2112
    %v2419 = vunpack.c.l.b16 %v2113
    %v2420 = vunpack.c.h.b16 %v2113
    %v2421 = vunpack.c.l.b16 %v2114
    %v2422 = vunpack.c.l.b16 %v2115
    %v2423 = vunpack.c.h.b16 %v2115
    %v2424 = vunpack.c.l.b16 %v2116
    %v2425 = vunpack.c.l.b16 %v2117
    %v2426 = vunpack.c.h.b16 %v2117
    %v2427 = vunpack.c.l.b16 %v2118
    %v2428 = vunpack.c.l.b16 %v2119
    %v2429 = vunpack.c.h.b16 %v2119
    %v2430 = vunpack.c.l.b16 %v2120
    %v2431 = vunpack.c.l.b16 %v2121
    %v2432 = vunpack.c.h.b16 %v2121
    %v2433 = vunpack.c.l.b16 %v2122
    %v2434 = vunpack.c.l.b16 %v2123
    %v2435 = vunpack.c.h.b16 %v2123
    %v2436 = vunpack.c.l.b16 %v2124
    %v2437 = vunpack.c.l.b16 %v2125
    %v2438 = vunpack.c.h.b16 %v2125
    %v2439 = vunpack.c.l.b16 %v2126
    %v2440 = vunpack.c.l.b16 %v2127
    %v2441 = vunpack.c.h.b16 %v2127
    %v2442 = vunpack.c.l.b16 %v2128
    %v2443 = vunpack.c.l.b16 %v2129
    %v2444 = vunpack.c.h.b16 %v2129
    %v2445 = vunpack.c.l.b16 %v2130
    %v2446 = vunpack.c.l.b16 %v2131
    %v2447 = vunpack.c.h.b16 %v2131
    %v2448 = vunpack.c.l.b16 %v2132
    %v2449 = vunpack.c.l.b16 %v2133
    %v2450 = vunpack.c.h.b16 %v2133
    %v2451 = vunpack.c.l.b16 %v2134
    %v2452 = vunpack.c.l.b16 %v2135
    %v2453 = vunpack.c.h.b16 %v2135
    %v2454 = vunpack.c.l.b16 %v2136
    %v2455 = vunpack.c.l.b16 %v2137
    %v2456 = vunpack.c.h.b16 %v2137
    %v2457 = vunpack.c.l.b16 %v2138
    %v2458 = vunpack.c.l.b16 %v2139
    %v2459 = vunpack.c.h.b16 %v2139
    %v2460 = vunpack.c.l.b16 %v2140
    %v2461 = vunpack.c.l.b16 %v2141
    %v2462 = vunpack.c.h.b16 %v2141
    %v2463 = vunpack.c.l.b16 %v2142
    %v2464 = vunpack.c.l.b16 %v2143
    %v2465 = vunpack.c.h.b16 %v2143
    %v2466 = vunpack.c.l.b16 %v2144
    %v2467 = vunpack.c.l.b16 %v2145
    %v2468 = vunpack.c.h.b16 %v2145
    %v2469 = vunpack.c.l.b16 %v2146
    %v2470 = vunpack.c.l.b16 %v2147
    %v2471 = vunpack.c.h.b16 %v2147
    %v2472 = vunpack.c.l.b16 %v2148
    %v2473 = vunpack.c.l.b16 %v2149
    %v2474 = vunpack.c.h.b16 %v2149
    %v2475 = vunpack.c.l.b16 %v2150
    %v2476 = vunpack.c.l.b16 %v2151
    %v2477 = vunpack.c.h.b16 %v2151
    %v2478 = vunpack.c.l.b16 %v2152
    %v2479 = vunpack.c.l.b16 %v2153
    %v2480 = vunpack.c.h.b16 %v2153
    %v2481 = vunpack.c.l.b16 %v2154
    %v2482 = vunpack.c.l.b16 %v2155
    %v2483 = vunpack.c.h.b16 %v2155
    %v2484 = vunpack.c.l.b16 %v2156
    %v2485 = vunpack.c.l.b16 %v2157
    %v2486 = vunpack.c.h.b16 %v2157
    %v2487 = vunpack.c.l.b16 %v2158
    %v2488 = vunpack.c.l.b16 %v2159
    %v2489 = vunpack.c.h.b16 %v2159
    %v2490 = vunpack.c.l.b16 %v2160
    %v2491 = vunpack.c.l.b16 %v2161
    %v2492 = vunpack.c.h.b16 %v2161
    %v2493 = vunpack.c.l.b16 %v2162
    %v2494 = vunpack.c.l.b16 %v2163
    %v2495 = vunpack.c.h.b16 %v2163
    %v2496 = vunpack.c.l.b16 %v2164
    %v2497 = vunpack.c.l.b16 %v2165
    %v2498 = vunpack.c.h.b16 %v2165
    %v2499 = vunpack.c.l.b16 %v2166
    %v2500 = vunpack.c.l.b16 %v2167
    %v2501 = vunpack.c.h.b16 %v2167
    %v2502 = vunpack.c.l.b16 %v2168
    %v2503 = vunpack.c.l.b16 %v2169
    %v2504 = vunpack.c.h.b16 %v2169
    %v2505 = vunpack.c.l.b16 %v2170
    %v2506 = vunpack.c.l.b16 %v2171
    %v2507 = vunpack.c.h.b16 %v2171
    %v2508 = vunpack.c.l.b16 %v2172
    %v2509 = vunpack.c.l.b16 %v2173
    %v2510 = vunpack.c.h.b16 %v2173
    %v2511 = vunpack.c.l.b16 %v2174
    %v2512 = vpack.c.b16 %v2323, %v2320
    %v2513 = vpack.c.b16 %v2324, %v2321
    %v2514 = vpack.c.b16 %v2325, %v2322
    %v2515 = vpack.c.b16 %v2329, %v2326
    %v2516 = vpack.c.b16 %v2330, %v2327
    %v2517 = vpack.c.b16 %v2331, %v2328
    %v2518 = vpack.c.b16 %v2335, %v2332
    %v2519 = vpack.c.b16 %v2336, %v2333
    %v2520 = vpack.c.b16 %v2337, %v2334
    %v2521 = vpack.c.b16 %v2341, %v2338
    %v2522 = vpack.c.b16 %v2342, %v2339
    %v2523 = vpack.c.b16 %v2343, %v2340
    %v2524 = vpack.c.b16 %v2347, %v2344
    %v2525 = vpack.c.b16 %v2348, %v2345
    %v2526 = vpack.c.b16 %v2349, %v2346
    %v2527 = vpack.c.b16 %v2353, %v2350
    %v2528 = vpack.c.b16 %v2354, %v2351
    %v2529 = vpack.c.b16 %v2355, %v2352
    %v2530 = vpack.c.b16 %v2359, %v2356
    %v2531 = vpack.c.b16 %v2360, %v2357
    %v2532 = vpack.c.b16 %v2361, %v2358
    %v2533 = vpack.c.b16 %v2365, %v2362
    %v2534 = vpack.c.b16 %v2366, %v2363
    %v2535 = vpack.c.b16 %v2367, %v2364
    %v2536 = vpack.c.b16 %v2371, %v2368
    %v2537 = vpack.c.b16 %v2372, %v2369
    %v2538 = vpack.c.b16 %v2373, %v2370
    %v2539 = vpack.c.b16 %v2377, %v2374
    %v2540 = vpack.c.b16 %v2378, %v2375
    %v2541 = vpack.c.b16 %v2379, %v2376
    %v2542 = vpack.c.b16 %v2383, %v2380
    %v2543 = vpack.c.b16 %v2384, %v2381
    %v2544 = vpack.c.b16 %v2385, %v2382
    %v2545 = vpack.c.b16 %v2389, %v2386
    %v2546 = vpack.c.b16 %v2390, %v2387
    %v2547 = vpack.c.b16 %v2391, %v2388
    %v2548 = vpack.c.b16 %v2395, %v2392
    %v2549 = vpack.c.b16 %v2396, %v2393
    %v2550 = vpack.c.b16 %v2397, %v2394
    %v2551 = vpack.c.b16 %v2401, %v2398
    %v2552 = vpack.c.b16 %v2402, %v2399
    %v2553 = vpack.c.b16 %v2403, %v2400
    %v2554 = vpack.c.b16 %v2407, %v2404
    %v2555 = vpack.c.b16 %v2408, %v2405
    %v2556 = vpack.c.b16 %v2409, %v2406
    %v2557 = vpack.c.b16 %v2413, %v2410
    %v2558 = vpack.c.b16 %v2414, %v2411
    %v2559 = vpack.c.b16 %v2415, %v2412
    %v2560 = vpack.c.b16 %v2419, %v2416
    %v2561 = vpack.c.b16 %v2420, %v2417
    %v2562 = vpack.c.b16 %v2421, %v2418
    %v2563 = vpack.c.b16 %v2425, %v2422
    %v2564 = vpack.c.b16 %v2426, %v2423
    %v2565 = vpack.c.b16 %v2427, %v2424
    %v2566 = vpack.c.b16 %v2431, %v2428
    %v2567 = vpack.c.b16 %v2432, %v2429
    %v2568 = vpack.c.b16 %v2433, %v2430
    %v2569 = vpack.c.b16 %v2437, %v2434
    %v2570 = vpack.c.b16 %v2438, %v2435
    %v2571 = vpack.c.b16 %v2439, %v2436
    %v2572 = vpack.c.b16 %v2443, %v2440
    %v2573 = vpack.c.b16 %v2444, %v2441
    %v2574 = vpack.c.b16 %v2445, %v2442
    %v2575 = vpack.c.b16 %v2449, %v2446
    %v2576 = vpack.c.b16 %v2450, %v2447
    %v2577 = vpack.c.b16 %v2451, %v2448
    %v2578 = vpack.c.b16 %v2455, %v2452
    %v2579 = vpack.c.b16 %v2456, %v2453
    %v2580 = vpack.c.b16 %v2457, %v2454
    %v2581 = vpack.c.b16 %v2461, %v2458
    %v2582 = vpack.c.b16 %v2462, %v2459
    %v2583 = vpack.c.b16 %v2463, %v2460
    %v2584 = vpack.c.b16 %v2467, %v2464
    %v2585 = vpack.c.b16 %v2468, %v2465
    %v2586 = vpack.c.b16 %v2469, %v2466
    %v2587 = vpack.c.b16 %v2473, %v2470
    %v2588 = vpack.c.b16 %v2474, %v2471
    %v2589 = vpack.c.b16 %v2475, %v2472
    %v2590 = vpack.c.b16 %v2479, %v2476
    %v2591 = vpack.c.b16 %v2480, %v2477
    %v2592 = vpack.c.b16 %v2481, %v2478
    %v2593 = vpack.c.b16 %v2485, %v2482
    %v2594 = vpack.c.b16 %v2486, %v2483
    %v2595 = vpack.c.b16 %v2487, %v2484
    %v2596 = vpack.c.b16 %v2491, %v2488
    %v2597 = vpack.c.b16 %v2492, %v2489
    %v2598 = vpack.c.b16 %v2493, %v2490
    %v2599 = vpack.c.b16 %v2497, %v2494
    %v2600 = vpack.c.b16 %v2498, %v2495
    %v2601 = vpack.c.b16 %v2499, %v2496
    %v2602 = vpack.c.b16 %v2503, %v2500
    %v2603 = vpack.c.b16 %v2504, %v2501
    %v2604 = vpack.c.b16 %v2505, %v2502
    %v2605 = vpack.c.b16 %v2509, %v2506
    %v2606 = vpack.c.b16 %v2510, %v2507
    %v2607 = vpack.c.b16 %v2511, %v2508
    %2704 = vmatprep.subr.bf16.mxu0 %v2513
    %2705 = vmatpush1.bf16.msra.mxu0 %v2512
    %2706 = vmatprep.subr.bf16.mxu0 %v2516
    %2707 = vmatpush1.bf16.msra.mxu0 %v2515
    %2708 = vmatprep.subr.bf16.mxu0 %v2519
    %2709 = vmatpush1.bf16.msra.mxu0 %v2518
    %2710 = vmatprep.subr.bf16.mxu0 %v2522
    %2711 = vmatpush1.bf16.msra.mxu0 %v2521
    %2712 = vmatprep.subr.bf16.mxu0 %v2525
    %2713 = vmatpush1.bf16.msra.mxu0 %v2524
    %2714 = vmatprep.subr.bf16.mxu0 %v2528
    %2715 = vmatpush1.bf16.msra.mxu0 %v2527
    %2716 = vmatprep.subr.bf16.mxu0 %v2531
    %2717 = vmatpush1.bf16.msra.mxu0 %v2530
    %2718 = vmatprep.subr.bf16.mxu0 %v2534
    %2719 = vmatpush1.bf16.msra.mxu0 %v2533
    %2720 = vmatprep.subr.bf16.mxu0 %v2537
    %2721 = vmatpush1.bf16.msra.mxu0 %v2536
    %2722 = vmatprep.subr.bf16.mxu0 %v2540
    %2723 = vmatpush1.bf16.msra.mxu0 %v2539
    %2724 = vmatprep.subr.bf16.mxu0 %v2543
    %2725 = vmatpush1.bf16.msra.mxu0 %v2542
    %2726 = vmatprep.subr.bf16.mxu0 %v2546
    %2727 = vmatpush1.bf16.msra.mxu0 %v2545
    %2728 = vmatprep.subr.bf16.mxu0 %v2549
    %2729 = vmatpush1.bf16.msra.mxu0 %v2548
    %2730 = vmatprep.subr.bf16.mxu0 %v2552
    %2731 = vmatpush1.bf16.msra.mxu0 %v2551
    %2732 = vmatprep.subr.bf16.mxu0 %v2555
    %2733 = vmatpush1.bf16.msra.mxu0 %v2554
    %2734 = vmatprep.subr.bf16.mxu0 %v2558
    %2735 = vmatpush1.bf16.msra.mxu0 %v2557
    %2736 = vmatprep.mubr.bf16.mxu0 %v2044
    %2737 = vmatmul.mubr.bf16.gmra.mrb[0].mxu0 %v2043
    %v2738 = vpop.f32.mrb[0].mxu0
    %v2739 = vadd.f32 %v2180, %v2738
    %v2740 = vpop.f32.mrb[0].mxu0
    %v2741 = vadd.f32 %v2184, %v2740
    %v2742 = vpop.f32.mrb[0].mxu0
    %v2743 = vadd.f32 %v2180, %v2742
    %v2744 = vpop.f32.mrb[0].mxu0
    %v2745 = vadd.f32 %v2184, %v2744
    %2746 = vdwg.mxu0
    %2747 = vmatprep.subr.bf16.mxu0 %v2561
    %2748 = vmatpush1.bf16.msra.mxu0 %v2560
    %2749 = vmatprep.subr.bf16.mxu0 %v2564
    %2750 = vmatpush1.bf16.msra.mxu0 %v2563
    %2751 = vmatprep.subr.bf16.mxu0 %v2567
    %2752 = vmatpush1.bf16.msra.mxu0 %v2566
    %2753 = vmatprep.subr.bf16.mxu0 %v2570
    %2754 = vmatpush1.bf16.msra.mxu0 %v2569
    %2755 = vmatprep.subr.bf16.mxu0 %v2573
    %2756 = vmatpush1.bf16.msra.mxu0 %v2572
    %2757 = vmatprep.subr.bf16.mxu0 %v2576
    %2758 = vmatpush1.bf16.msra.mxu0 %v2575
    %2759 = vmatprep.subr.bf16.mxu0 %v2579
    %2760 = vmatpush1.bf16.msra.mxu0 %v2578
    %2761 = vmatprep.subr.bf16.mxu0 %v2582
    %2762 = vmatpush1.bf16.msra.mxu0 %v2581
    %2763 = vmatprep.subr.bf16.mxu0 %v2585
    %2764 = vmatpush1.bf16.msra.mxu0 %v2584
    %2765 = vmatprep.subr.bf16.mxu0 %v2588
    %2766 = vmatpush1.bf16.msra.mxu0 %v2587
    %2767 = vmatprep.subr.bf16.mxu0 %v2591
    %2768 = vmatpush1.bf16.msra.mxu0 %v2590
    %2769 = vmatprep.subr.bf16.mxu0 %v2594
    %2770 = vmatpush1.bf16.msra.mxu0 %v2593
    %2771 = vmatprep.subr.bf16.mxu0 %v2597
    %2772 = vmatpush1.bf16.msra.mxu0 %v2596
    %2773 = vmatprep.subr.bf16.mxu0 %v2600
    %2774 = vmatpush1.bf16.msra.mxu0 %v2599
    %2775 = vmatprep.subr.bf16.mxu0 %v2603
    %2776 = vmatpush1.bf16.msra.mxu0 %v2602
    %2777 = vmatprep.subr.bf16.mxu0 %v2606
    %2778 = vmatpush1.bf16.msra.mxu0 %v2605
    %2779 = vmatprep.mubr.bf16.mxu0 %v2046
    %2780 = vmatmul.mubr.bf16.gmra.mrb[0].mxu0 %v2045
    %v2781 = vpop.f32.mrb[0].mxu0
    %v2782 = vadd.f32 %v2739, %v2781
    %v2783 = vpop.f32.mrb[0].mxu0
    %v2784 = vadd.f32 %v2741, %v2783
    %v2785 = vpop.f32.mrb[0].mxu0
    %v2786 = vadd.f32 %v2743, %v2785
    %v2787 = vpop.f32.mrb[0].mxu0
    %v2788 = vadd.f32 %v2745, %v2787
    %2789 = vdwg.mxu0
    %2790 = vmatprep.subr.bf16.mxu0 0
    %2791 = vmatpush1.bf16.msra.mxu0 %v2514
    %2792 = vmatprep.subr.bf16.mxu0 0
    %2793 = vmatpush1.bf16.msra.mxu0 %v2517
    %2794 = vmatprep.subr.bf16.mxu0 0
    %2795 = vmatpush1.bf16.msra.mxu0 %v2520
    %2796 = vmatprep.subr.bf16.mxu0 0
    %2797 = vmatpush1.bf16.msra.mxu0 %v2523
    %2798 = vmatprep.subr.bf16.mxu0 0
    %2799 = vmatpush1.bf16.msra.mxu0 %v2526
    %2800 = vmatprep.subr.bf16.mxu0 0
    %2801 = vmatpush1.bf16.msra.mxu0 %v2529
    %2802 = vmatprep.subr.bf16.mxu0 0
    %2803 = vmatpush1.bf16.msra.mxu0 %v2532
    %2804 = vmatprep.subr.bf16.mxu0 0
    %2805 = vmatpush1.bf16.msra.mxu0 %v2535
    %2806 = vmatprep.subr.bf16.mxu0 0
    %2807 = vmatpush1.bf16.msra.mxu0 %v2538
    %2808 = vmatprep.subr.bf16.mxu0 0
    %2809 = vmatpush1.bf16.msra.mxu0 %v2541
    %2810 = vmatprep.subr.bf16.mxu0 0
    %2811 = vmatpush1.bf16.msra.mxu0 %v2544
    %2812 = vmatprep.subr.bf16.mxu0 0
    %2813 = vmatpush1.bf16.msra.mxu0 %v2547
    %2814 = vmatprep.subr.bf16.mxu0 0
    %2815 = vmatpush1.bf16.msra.mxu0 %v2550
    %2816 = vmatprep.subr.bf16.mxu0 0
    %2817 = vmatpush1.bf16.msra.mxu0 %v2553
    %2818 = vmatprep.subr.bf16.mxu0 0
    %2819 = vmatpush1.bf16.msra.mxu0 %v2556
    %2820 = vmatprep.subr.bf16.mxu0 0
    %2821 = vmatpush1.bf16.msra.mxu0 %v2559
    %2822 = vmatprep.mubr.bf16.mxu0 %v2044
    %2823 = vmatmul.mubr.bf16.gmra.mrb[0].mxu0 %v2043
    %v2824 = vpop.f32.mrb[0].mxu0
    %v2825 = vadd.f32 %v2188, %v2824
    %v2826 = vpop.f32.mrb[0].mxu0
    %v2827 = vpop.f32.mrb[0].mxu0
    %v2828 = vadd.f32 %v2188, %v2827
    %v2829 = vpop.f32.mrb[0].mxu0
    %2830 = vdwg.mxu0
    %2831 = vmatprep.subr.bf16.mxu0 0
    %2832 = vmatpush1.bf16.msra.mxu0 %v2562
    %2833 = vmatprep.subr.bf16.mxu0 0
    %2834 = vmatpush1.bf16.msra.mxu0 %v2565
    %2835 = vmatprep.subr.bf16.mxu0 0
    %2836 = vmatpush1.bf16.msra.mxu0 %v2568
    %2837 = vmatprep.subr.bf16.mxu0 0
    %2838 = vmatpush1.bf16.msra.mxu0 %v2571
    %2839 = vmatprep.subr.bf16.mxu0 0
    %2840 = vmatpush1.bf16.msra.mxu0 %v2574
    %2841 = vmatprep.subr.bf16.mxu0 0
    %2842 = vmatpush1.bf16.msra.mxu0 %v2577
    %2843 = vmatprep.subr.bf16.mxu0 0
    %2844 = vmatpush1.bf16.msra.mxu0 %v2580
    %2845 = vmatprep.subr.bf16.mxu0 0
    %2846 = vmatpush1.bf16.msra.mxu0 %v2583
    %2847 = vmatprep.subr.bf16.mxu0 0
    %2848 = vmatpush1.bf16.msra.mxu0 %v2586
    %2849 = vmatprep.subr.bf16.mxu0 0
    %2850 = vmatpush1.bf16.msra.mxu0 %v2589
    %2851 = vmatprep.subr.bf16.mxu0 0
    %2852 = vmatpush1.bf16.msra.mxu0 %v2592
    %2853 = vmatprep.subr.bf16.mxu0 0
    %2854 = vmatpush1.bf16.msra.mxu0 %v2595
    %2855 = vmatprep.subr.bf16.mxu0 0
    %2856 = vmatpush1.bf16.msra.mxu0 %v2598
    %2857 = vmatprep.subr.bf16.mxu0 0
    %2858 = vmatpush1.bf16.msra.mxu0 %v2601
    %2859 = vmatprep.subr.bf16.mxu0 0
    %2860 = vmatpush1.bf16.msra.mxu0 %v2604
    %2861 = vmatprep.subr.bf16.mxu0 0
    %2862 = vmatpush1.bf16.msra.mxu0 %v2607
    %2863 = vmatprep.mubr.bf16.mxu0 %v2046
    %2864 = vmatmul.mubr.bf16.gmra.mrb[0].mxu0 %v2045
    %v2865 = vpop.f32.mrb[0].mxu0
    %v2866 = vadd.f32 %v2825, %v2865
    %v2867 = vpop.f32.mrb[0].mxu0
    %v2868 = vpop.f32.mrb[0].mxu0
    %v2869 = vadd.f32 %v2828, %v2868
    %v2870 = vpop.f32.mrb[0].mxu0
    %2871 = vdwg.mxu0
    %v2872 = vpack.c.bf16 %v2786, %v2782
    %v2873 = vpack.c.bf16 %v2788, %v2784
    %v2874 = vpack.c.bf16 %v2869, %v2866
    %v2875 = vmax.bf16 %v2872, 0
    %v2876 = vmax.bf16 %v2873, 0
    %v2877 = vmax.bf16 %v2874, 0
    %v2878 = vld [vmem:[#allocation11] sm:$0xf]
    %v2879 = vld [vmem:[#allocation11 + $0x4] sm:$0xf]
    %v2880 = vld [vmem:[#allocation11 + $0x8] sm:$0xf]
    %v2881 = vld [vmem:[#allocation11 + $0xc] sm:$0xf]
    %v2882 = vld [vmem:[#allocation11 + $0x10] sm:$0xf]
    %v2883 = vld [vmem:[#allocation11 + $0x14] sm:$0xf]
    %v2884 = vld [vmem:[#allocation11 + $0x18] sm:$0xf]
    %v2885 = vld [vmem:[#allocation11 + $0x1c] sm:$0xf]
    %v2886 = vld [vmem:[#allocation11 + $0x20] sm:$0xf]
    %v2887 = vld [vmem:[#allocation11 + $0x24] sm:$0xf]
    %v2888 = vld [vmem:[#allocation11 + $0x28] sm:$0xf]
    %v2889 = vld [vmem:[#allocation11 + $0x2c] sm:$0xf]
    %v2890 = vld [vmem:[#allocation11 + $0x30] sm:$0xf]
    %v2891 = vld [vmem:[#allocation11 + $0x34] sm:$0xf]
    %v2892 = vld [vmem:[#allocation11 + $0x38] sm:$0xf]
    %v2893 = vld [vmem:[#allocation11 + $0x3c] sm:$0xf]
    %v2894 = vld [vmem:[#allocation11 + $0x40] sm:$0xf]
    %v2895 = vld [vmem:[#allocation11 + $0x44] sm:$0xf]
    %v2896 = vld [vmem:[#allocation11 + $0x48] sm:$0xf]
    %v2897 = vld [vmem:[#allocation11 + $0x4c] sm:$0xf]
    %v2898 = vld [vmem:[#allocation11 + $0x50] sm:$0xf]
    %v2899 = vld [vmem:[#allocation11 + $0x54] sm:$0xf]
    %v2900 = vld [vmem:[#allocation11 + $0x58] sm:$0xf]
    %v2901 = vld [vmem:[#allocation11 + $0x5c] sm:$0xf]
    %v2902 = vld [vmem:[#allocation11 + $0x60] sm:$0xf]
    %v2903 = vld [vmem:[#allocation11 + $0x64] sm:$0xf]
    %v2904 = vld [vmem:[#allocation11 + $0x68] sm:$0xf]
    %v2905 = vld [vmem:[#allocation11 + $0x6c] sm:$0xf]
    %v2906 = vld [vmem:[#allocation11 + $0x70] sm:$0xf]
    %v2907 = vld [vmem:[#allocation11 + $0x74] sm:$0xf]
    %v2908 = vld [vmem:[#allocation11 + $0x78] sm:$0xf]
    %v2909 = vld [vmem:[#allocation11 + $0x7c] sm:$0xf]
    %v2910 = vld [vmem:[#allocation11 + $0x80] sm:$0xf]
    %v2911 = vld [vmem:[#allocation11 + $0x84] sm:$0xf]
    %v2912 = vld [vmem:[#allocation11 + $0x88] sm:$0xf]
    %v2913 = vld [vmem:[#allocation11 + $0x8c] sm:$0xf]
    %v2914 = vld [vmem:[#allocation11 + $0x90] sm:$0xf]
    %v2915 = vld [vmem:[#allocation11 + $0x94] sm:$0xf]
    %v2916 = vld [vmem:[#allocation11 + $0x98] sm:$0xf]
    %v2917 = vld [vmem:[#allocation11 + $0x9c] sm:$0xf]
    %v2918 = vld [vmem:[#allocation11 + $0xa0] sm:$0xf]
    %v2919 = vld [vmem:[#allocation11 + $0xa4] sm:$0xf]
    %v2920 = vld [vmem:[#allocation11 + $0xa8] sm:$0xf]
    %v2921 = vld [vmem:[#allocation11 + $0xac] sm:$0xf]
    %v2922 = vld [vmem:[#allocation11 + $0xb0] sm:$0xf]
    %v2923 = vld [vmem:[#allocation11 + $0xb4] sm:$0xf]
    %v2924 = vld [vmem:[#allocation11 + $0xb8] sm:$0xf]
    %v2925 = vld [vmem:[#allocation11 + $0xbc] sm:$0xf]
    %v2926 = vld [vmem:[%s10] sm:$0x1]
    %v2928 = vlaneseq
    %v2929 = vshrl.u32 %v2928, 7
    %v2930 = vsub.s32 0, %v2929
    %v2931 = vrot.slane %v2926, %v2930
    %v2981 = vunpack.c.l.b16 %v2878
    %v2982 = vunpack.c.l.b16 %v2879
    %v2983 = vunpack.c.l.b16 %v2880
    %v2984 = vunpack.c.l.b16 %v2881
    %v2985 = vunpack.c.l.b16 %v2882
    %v2986 = vunpack.c.l.b16 %v2883
    %v2987 = vunpack.c.l.b16 %v2884
    %v2988 = vunpack.c.l.b16 %v2885
    %v2989 = vunpack.c.l.b16 %v2886
    %v2990 = vunpack.c.l.b16 %v2887
    %v2991 = vunpack.c.l.b16 %v2888
    %v2992 = vunpack.c.l.b16 %v2889
    %v2993 = vunpack.c.l.b16 %v2890
    %v2994 = vunpack.c.l.b16 %v2891
    %v2995 = vunpack.c.l.b16 %v2892
    %v2996 = vunpack.c.l.b16 %v2893
    %v2997 = vunpack.c.l.b16 %v2894
    %v2998 = vunpack.c.l.b16 %v2895
    %v2999 = vunpack.c.l.b16 %v2896
    %v3000 = vunpack.c.l.b16 %v2897
    %v3001 = vunpack.c.l.b16 %v2898
    %v3002 = vunpack.c.l.b16 %v2899
    %v3003 = vunpack.c.l.b16 %v2900
    %v3004 = vunpack.c.l.b16 %v2901
    %v3005 = vunpack.c.l.b16 %v2902
    %v3006 = vunpack.c.l.b16 %v2903
    %v3007 = vunpack.c.l.b16 %v2904
    %v3008 = vunpack.c.l.b16 %v2905
    %v3009 = vunpack.c.l.b16 %v2906
    %v3010 = vunpack.c.l.b16 %v2907
    %v3011 = vunpack.c.l.b16 %v2908
    %v3012 = vunpack.c.l.b16 %v2909
    %v3013 = vunpack.c.l.b16 %v2910
    %v3014 = vunpack.c.l.b16 %v2911
    %v3015 = vunpack.c.l.b16 %v2912
    %v3016 = vunpack.c.l.b16 %v2913
    %v3017 = vunpack.c.l.b16 %v2914
    %v3018 = vunpack.c.l.b16 %v2915
    %v3019 = vunpack.c.l.b16 %v2916
    %v3020 = vunpack.c.l.b16 %v2917
    %v3021 = vunpack.c.l.b16 %v2918
    %v3022 = vunpack.c.l.b16 %v2919
    %v3023 = vunpack.c.l.b16 %v2920
    %v3024 = vunpack.c.l.b16 %v2921
    %v3025 = vunpack.c.l.b16 %v2922
    %v3026 = vunpack.c.l.b16 %v2923
    %v3027 = vunpack.c.l.b16 %v2924
    %v3028 = vunpack.c.l.b16 %v2925
    %v3029 = vpack.c.b16 %v2982, %v2981
    %v3030 = vpack.c.b16 %v2984, %v2983
    %v3031 = vpack.c.b16 %v2986, %v2985
    %v3032 = vpack.c.b16 %v2988, %v2987
    %v3033 = vpack.c.b16 %v2990, %v2989
    %v3034 = vpack.c.b16 %v2992, %v2991
    %v3035 = vpack.c.b16 %v2994, %v2993
    %v3036 = vpack.c.b16 %v2996, %v2995
    %v3037 = vpack.c.b16 %v2998, %v2997
    %v3038 = vpack.c.b16 %v3000, %v2999
    %v3039 = vpack.c.b16 %v3002, %v3001
    %v3040 = vpack.c.b16 %v3004, %v3003
    %v3041 = vpack.c.b16 %v3006, %v3005
    %v3042 = vpack.c.b16 %v3008, %v3007
    %v3043 = vpack.c.b16 %v3010, %v3009
    %v3044 = vpack.c.b16 %v3012, %v3011
    %v3045 = vpack.c.b16 %v3014, %v3013
    %v3046 = vpack.c.b16 %v3016, %v3015
    %v3047 = vpack.c.b16 %v3018, %v3017
    %v3048 = vpack.c.b16 %v3020, %v3019
    %v3049 = vpack.c.b16 %v3022, %v3021
    %v3050 = vpack.c.b16 %v3024, %v3023
    %v3051 = vpack.c.b16 %v3026, %v3025
    %v3052 = vpack.c.b16 %v3028, %v3027
    %3077 = vmatprep.subr.bf16.mxu0 0
    %3078 = vmatpush1.bf16.msra.mxu0 %v3029
    %3079 = vmatprep.subr.bf16.mxu0 0
    %3080 = vmatpush1.bf16.msra.mxu0 %v3030
    %3081 = vmatprep.subr.bf16.mxu0 0
    %3082 = vmatpush1.bf16.msra.mxu0 %v3031
    %3083 = vmatprep.subr.bf16.mxu0 0
    %3084 = vmatpush1.bf16.msra.mxu0 %v3032
    %3085 = vmatprep.subr.bf16.mxu0 0
    %3086 = vmatpush1.bf16.msra.mxu0 %v3033
    %3087 = vmatprep.subr.bf16.mxu0 0
    %3088 = vmatpush1.bf16.msra.mxu0 %v3034
    %3089 = vmatprep.subr.bf16.mxu0 0
    %3090 = vmatpush1.bf16.msra.mxu0 %v3035
    %3091 = vmatprep.subr.bf16.mxu0 0
    %3092 = vmatpush1.bf16.msra.mxu0 %v3036
    %3093 = vmatprep.subr.bf16.mxu0 0
    %3094 = vmatpush1.bf16.msra.mxu0 %v3037
    %3095 = vmatprep.subr.bf16.mxu0 0
    %3096 = vmatpush1.bf16.msra.mxu0 %v3038
    %3097 = vmatprep.subr.bf16.mxu0 0
    %3098 = vmatpush1.bf16.msra.mxu0 %v3039
    %3099 = vmatprep.subr.bf16.mxu0 0
    %3100 = vmatpush1.bf16.msra.mxu0 %v3040
    %3101 = vmatprep.subr.bf16.mxu0 0
    %3102 = vmatpush1.bf16.msra.mxu0 %v3041
    %3103 = vmatprep.subr.bf16.mxu0 0
    %3104 = vmatpush1.bf16.msra.mxu0 %v3042
    %3105 = vmatprep.subr.bf16.mxu0 0
    %3106 = vmatpush1.bf16.msra.mxu0 %v3043
    %3107 = vmatprep.subr.bf16.mxu0 0
    %3108 = vmatpush1.bf16.msra.mxu0 %v3044
    %3109 = vmatprep.mubr.bf16.mxu0 %v2876
    %3110 = vmatmul.mubr.bf16.gmra.mrb[0].mxu0 %v2875
    %v3111 = vpop.f32.mrb[0].mxu0
    %v3112 = vadd.f32 %v2931, %v3111
    %v3113 = vpop.f32.mrb[0].mxu0
    %v3114 = vpop.f32.mrb[0].mxu0
    %v3115 = vadd.f32 %v2931, %v3114
    %v3116 = vpop.f32.mrb[0].mxu0
    %3117 = vdwg.mxu0
    %3118 = vmatprep.subr.bf16.mxu0 0
    %3119 = vmatpush1.bf16.msra.mxu0 %v3045
    %3120 = vmatprep.subr.bf16.mxu0 0
    %3121 = vmatpush1.bf16.msra.mxu0 %v3046
    %3122 = vmatprep.subr.bf16.mxu0 0
    %3123 = vmatpush1.bf16.msra.mxu0 %v3047
    %3124 = vmatprep.subr.bf16.mxu0 0
    %3125 = vmatpush1.bf16.msra.mxu0 %v3048
    %3126 = vmatprep.subr.bf16.mxu0 0
    %3127 = vmatpush1.bf16.msra.mxu0 %v3049
    %3128 = vmatprep.subr.bf16.mxu0 0
    %3129 = vmatpush1.bf16.msra.mxu0 %v3050
    %3130 = vmatprep.subr.bf16.mxu0 0
    %3131 = vmatpush1.bf16.msra.mxu0 %v3051
    %3132 = vmatprep.subr.bf16.mxu0 0
    %3133 = vmatpush1.bf16.msra.mxu0 %v3052
    %3134 = vmatprep.subr.bf16.mxu0 0
    %3135 = vmatpush1.bf16.msra.mxu0 0
    %3136 = vmatprep.subr.bf16.mxu0 0
    %3137 = vmatpush1.bf16.msra.mxu0 0
    %3138 = vmatprep.subr.bf16.mxu0 0
    %3139 = vmatpush1.bf16.msra.mxu0 0
    %3140 = vmatprep.subr.bf16.mxu0 0
    %3141 = vmatpush1.bf16.msra.mxu0 0
    %3142 = vmatprep.subr.bf16.mxu0 0
    %3143 = vmatpush1.bf16.msra.mxu0 0
    %3144 = vmatprep.subr.bf16.mxu0 0
    %3145 = vmatpush1.bf16.msra.mxu0 0
    %3146 = vmatprep.subr.bf16.mxu0 0
    %3147 = vmatpush1.bf16.msra.mxu0 0
    %3148 = vmatprep.subr.bf16.mxu0 0
    %3149 = vmatpush1.bf16.msra.mxu0 0
    %3150 = vmatprep.mubr.bf16.mxu0 0
    %3151 = vmatmul.mubr.bf16.gmra.mrb[0].mxu0 %v2877
    %v3152 = vpop.f32.mrb[0].mxu0
    %v3153 = vadd.f32 %v3112, %v3152
    %v3154 = vpop.f32.mrb[0].mxu0
    %v3155 = vpop.f32.mrb[0].mxu0
    %v3156 = vadd.f32 %v3115, %v3155
    %v3157 = vpop.f32.mrb[0].mxu0
    %3158 = vdwg.mxu0
    %3159 = vst [vmem:[#allocation13] sm:$0xff] %v3153
    %3160 = vst [vmem:[#allocation13 + $0x8] sm:$0xff] %v3156
    // Predicated region
    $region70: #{tpu_custom_call.1} parent=1 // pred_check
      _
    $region71: #{tpu_custom_call.1} parent=1 // pred_check_branch
      %3162 = sbr.rel (0) target = $region73
    $region72: #{tpu_custom_call.1} parent=1 // pred_region
      %s3164 = ssub.s32 256, 256
      %3165 = vsyncadd [#allocation4], %s3164
      %s3166 = sshll.u32 [#allocation13], 4
      %s3167 = int_to_ptr.vmem [resolvable:$true] %s3166
      %3172 = dma.vmem_to_hbm [thread:$0]  %s3167, 256, %s11, [#allocation4], 128, 128, 8
    $region73: #{tpu_custom_call.1} parent=1 // pred_fallthru
      _
    // Predicated region
    $region74: #{tpu_custom_call.1} parent=1 // pred_check
      _
    $region75: #{tpu_custom_call.1} parent=1 // pred_check_branch
      %3174 = sbr.rel (0) target = $region77
    $region76: #{tpu_custom_call.1} parent=1 // pred_region
      %3175 = dma.done [#allocation4], 256
    $region77: #{tpu_custom_call.1} parent=1 // pred_fallthru
      _
    %3176 = vsyncpa [#allocation3], 1
    %3177 = vsyncpa [#allocation6], 1
    %3178 = vsyncpa [#allocation9], 1
    %3179 = vsyncpa [#allocation12], 1
    %3180 = vsyncpa [#allocation4], 1

</llo_original>
